<compile_context>
chip_gen: v7x
topology: tpu7x:2x2x1
jax: 0.10.0
libtpu: 0.0.40
codegen_flags: <defaults>
</compile_context>

<pallas_src>
import functools

import jax
import jax.numpy as jnp
from jax.experimental import pallas as pl
from jax.experimental.pallas import tpu as pltpu


def _round_up(x, m):
    return (x + m - 1) // m * m


# -----------------------------------------------------------------------------
# Fused Pallas kernel: backbone 3x3 conv -> relu -> [hm|wh|reg] heads
# -----------------------------------------------------------------------------
def _centernet_stack_kernel(x_ref, m_ref, wbb_ref, bbb_ref, w3_ref, b3_ref,
                            w1_ref, b1_ref, out_ref, xcol_ref, fcol_ref, *, W):
    """One per-stack grid step; batch is folded into the lane axis.

    x_ref   : (Cp, B*HW)      input, NCHW with Cin zero-padded to Cp=8, lanes = b*HW + h*W + w
    m_ref   : (8, B*HW)       boundary masks: [h>=1, h<=H-2, w>=1, w<=W-2, 1,1,1,1]
    wbb_ref : (Cf, 9*Cp)      backbone 3x3 conv, im2col layout (tap-major, channel-minor), bf16
    bbb_ref : (Cf, 1)         f32
    w3_ref  : (3*Ch, 9*Cf)    hm/wh/reg 3x3 convs concatenated on Cout, bf16
    b3_ref  : (3*Ch, 1)       f32
    w1_ref  : (P, 3*Ch)       block-diagonal fused 1x1 convs (P = round_up(nc+3, 8)), bf16
    b1_ref  : (P, 1)          f32
    out_ref : (P, B*HW)       fused [hm|wh|reg|pad] output, f32
    xcol_ref: (9*Cp, B*HW)    VMEM scratch (im2col slab of the input)
    fcol_ref: (9*Cf, B*HW)    VMEM scratch (im2col slab of the feature map)
    """
    f32 = jnp.float32
    bf16 = jnp.bfloat16
    N = x_ref.shape[1]                                  # B*H*W (static)

    # Boundary masks: loaded once per step from a constant VMEM input.
    m = m_ref[...] > 0.5
    row_m = {-1: m[0:1, :], 0: None, 1: m[1:2, :]}
    col_m = {-1: m[2:3, :], 0: None, 1: m[3:4, :]}
    tap_masks = []
    for dh in (-1, 0, 1):
        for dw in (-1, 0, 1):
            rm, cm = row_m[dh], col_m[dw]
            if rm is None and cm is None:
                tap_masks.append(None)
            elif rm is None:
                tap_masks.append(cm)
            elif cm is None:
                tap_masks.append(rm)
            else:
                tap_masks.append(jnp.logical_and(rm, cm))

    def im2col_3x3(v, col_ref):
        # v: (C, N) f32 -> col_ref: (9*C, N), 'same' 3x3 patches.
        # Row index = t*C + c with t = (dh+1)*3 + (dw+1)  (matches weight layout).
        # pltpu.roll wraps across image/batch boundaries, but every wrapped
        # position has an out-of-range h+dh or w+dw and is zeroed by the mask.
        C = v.shape[0]
        t = 0
        for dh in (-1, 0, 1):
            for dw in (-1, 0, 1):
                delta = dh * W + dw                      # static
                sh = v if delta == 0 else pltpu.roll(v, (-delta) % N, 1)
                msk = tap_masks[t]
                if msk is not None:
                    sh = jnp.where(msk, sh, 0.0)         # select, not multiply
                col_ref[t * C:(t + 1) * C, :] = sh       # aligned 8-row store
                t += 1

    # ---- backbone stub: one 3x3 conv as a single K=9*Cp MXU matmul ----------
    # TODO(synk): real backbone is get_backbone(cfg.Model.backbone)
    # (hourglass/resnet, not defined in the snippet); stubbed as one 3x3 conv.
    im2col_3x3(x_ref[...], xcol_ref)
    feat = jnp.dot(wbb_ref[...], xcol_ref[...].astype(bf16),
                   preferred_element_type=f32) + bbb_ref[...]
    feat = jnp.maximum(feat, 0.0)                        # torch.relu(feat)

    # ---- fused detector heads: [hm|wh|reg] 3x3 convs, relu, block-diag 1x1 --
    im2col_3x3(feat, fcol_ref)
    mid = jnp.dot(w3_ref[...], fcol_ref[...].astype(bf16),
                  preferred_element_type=f32) + b3_ref[...]
    mid = jnp.maximum(mid, 0.0)
    out = jnp.dot(w1_ref[...], mid.astype(bf16),
                  preferred_element_type=f32) + b1_ref[...]
    out_ref[...] = out                                   # single aligned (P, N) store


# -----------------------------------------------------------------------------
# Boundary masks (computed once in the wrapper, passed as a constant input)
# -----------------------------------------------------------------------------
def _boundary_masks(B, H, W):
    N = B * H * W
    pix = jnp.arange(N, dtype=jnp.int32) % (H * W)
    h = pix // W
    w = pix % W
    ones = jnp.ones((N,), jnp.float32)
    return jnp.stack([
        (h >= 1).astype(jnp.float32),
        (h <= H - 2).astype(jnp.float32),
        (w >= 1).astype(jnp.float32),
        (w <= W - 2).astype(jnp.float32),
        ones, ones, ones, ones,
    ])                                                    # (8, N)


# -----------------------------------------------------------------------------
# Model: parameters + forward (mirrors CenterNet.forward)
# -----------------------------------------------------------------------------
class CenterNetPallas:
    def __init__(self, num_stacks=2, num_classes=4, in_ch=4, feat_ch=8,
                 head_ch=16, seed=0):
        self.num_stacks = S = num_stacks
        self.num_classes = nc = num_classes
        self.in_ch = in_ch
        self.in_ch_pad = Cp = _round_up(in_ch, 8)
        self.feat_ch = feat_ch
        self.head_ch = head_ch
        self.out_pad = P = _round_up(nc + 3, 8)

        ks = iter(jax.random.split(jax.random.PRNGKey(seed), 16))

        def nrm(shape, scale=0.1):
            return (scale * jax.random.normal(next(ks), shape)).astype(jnp.float32)

        # TODO(synk): real backbone is get_backbone(cfg.Model.backbone); stubbed
        # as one 3x3 conv per stack.  im2col weight layout, Cin zero-padded to 8.
        wbb_real = nrm((S, feat_ch, 9, in_ch))
        wbb = jnp.zeros((S, feat_ch, 9, Cp), jnp.float32)
        wbb = wbb.at[..., :in_ch].set(wbb_real)
        self.wbb = wbb.reshape(S, feat_ch, 9 * Cp).astype(jnp.bfloat16)
        self.bbb = nrm((S, feat_ch, 1))

        # TODO(synk): CenterNetDetector internals not given; modeled as
        # conv3x3 -> relu -> conv1x1, fused across the three heads.
        self.w3 = nrm((S, 3 * head_ch, 9 * feat_ch)).astype(jnp.bfloat16)
        self.b3 = nrm((S, 3 * head_ch, 1))

        w1 = jnp.zeros((S, P, 3 * head_ch), jnp.float32)
        w1 = w1.at[:, 0:nc, 0:head_ch].set(nrm((S, nc, head_ch)))                     # hm
        w1 = w1.at[:, nc:nc + 1, head_ch:2 * head_ch].set(nrm((S, 1, head_ch)))       # wh
        w1 = w1.at[:, nc + 1:nc + 3, 2 * head_ch:3 * head_ch].set(nrm((S, 2, head_ch)))  # reg
        self.w1 = w1.astype(jnp.bfloat16)

        b1 = jnp.zeros((S, P, 1), jnp.float32)
        b1 = b1.at[:, 0:nc].set(-2.19)            # standard CenterNet heatmap bias init
        b1 = b1.at[:, nc:nc + 3].set(nrm((S, 3, 1)))
        self.b1 = b1

    # -------------------------------------------------------------------------
    def _build_forward(self, B, H, W):
        S, Cp, Cf = self.num_stacks, self.in_ch_pad, self.feat_ch
        Ch3, P = 3 * self.head_ch, self.out_pad
        N = B * H * W

        kernel = functools.partial(_centernet_stack_kernel, W=W)

        def const_spec(rows):                      # stack-invariant inputs
            return pl.BlockSpec((rows, N), lambda s: (0, 0))

        def w_spec(shape):                         # per-stack weight block
            return pl.BlockSpec((pl.Squeezed(),) + tuple(shape[1:]),
                                lambda s: (s, 0, 0))

        return pl.pallas_call(
            kernel,
            out_shape=jax.ShapeDtypeStruct((S, P, N), jnp.float32),
            grid=(S,),
            in_specs=[
                const_spec(Cp),                    # x (Cp, B*HW)
                const_spec(8),                     # boundary masks
                w_spec((S, Cf, 9 * Cp)),           # wbb
                w_spec((S, Cf, 1)),                # bbb
                w_spec((S, Ch3, 9 * Cf)),          # w3
                w_spec((S, Ch3, 1)),               # b3
                w_spec((S, P, Ch3)),               # w1
                w_spec((S, P, 1)),                 # b1
            ],
            out_specs=pl.BlockSpec((pl.Squeezed(), P, N), lambda s: (s, 0, 0)),
            scratch_shapes=[pltpu.VMEM((9 * Cp, N), jnp.float32),
                            pltpu.VMEM((9 * Cf, N), jnp.float32)],
            compiler_params=pltpu.CompilerParams(
                dimension_semantics=("parallel",)),
        )

    # -------------------------------------------------------------------------
    def __call__(self, x_nchw):
        B, Cin, H, W = x_nchw.shape
        assert Cin == self.in_ch
        Cp = self.in_ch_pad
        N = B * H * W

        x = jnp.asarray(x_nchw, jnp.float32)
        if Cp > Cin:
            x = jnp.pad(x, ((0, 0), (0, Cp - Cin), (0, 0), (0, 0)))
        # Fold batch into the lane axis: (Cp, B*HW), lane = b*HW + h*W + w.
        x_flat = x.transpose(1, 0, 2, 3).reshape(Cp, N)
        masks = _boundary_masks(B, H, W)

        fwd = self._build_forward(B, H, W)
        out = fwd(x_flat, masks, self.wbb, self.bbb, self.w3, self.b3,
                  self.w1, self.b1)                       # (S, P, B*HW)

        nc = self.num_classes
        hms, whs, regs = [], [], []
        for s in range(self.num_stacks):
            o = out[s].reshape(-1, B, H, W).transpose(1, 0, 2, 3)   # (B, P, H, W)
            hms.append(o[:, 0:nc])
            whs.append(o[:, nc:nc + 1])
            regs.append(o[:, nc + 1:nc + 3])
        return hms, whs, regs


# -----------------------------------------------------------------------------
# Pure-JAX reference (lax.conv) to validate the fused kernel.  Activations are
# round-tripped through bf16 at each matmul input to mirror the kernel's
# bf16 MXU inputs (f32 accumulation in both), keeping the comparison tight.
# -----------------------------------------------------------------------------
def _reference_forward(x_nchw, model):
    nc = model.num_classes
    Cp = model.in_ch_pad
    hp = jax.lax.Precision.HIGHEST
    bf = lambda a: a.astype(jnp.bfloat16).astype(jnp.float32)

    B, Cin, H, W = x_nchw.shape
    x = jnp.asarray(x_nchw, jnp.float32)
    if Cp > Cin:
        x = jnp.pad(x, ((0, 0), (0, Cp - Cin), (0, 0), (0, 0)))

    def conv3x3(v, wflat, b):
        cout, kcin = wflat.shape
        cin = kcin // 9
        w = wflat.astype(jnp.float32).reshape(cout, 3, 3, cin).transpose(0, 3, 1, 2)  # OIHW
        y = jax.lax.conv_general_dilated(
            bf(v), w, window_strides=(1, 1), padding="SAME",
            dimension_numbers=("NCHW", "OIHW", "NCHW"), precision=hp)
        return y + b.reshape(1, cout, 1, 1)

    hms, whs, regs = [], [], []
    for s in range(model.num_stacks):
        feat = jnp.maximum(conv3x3(x, model.wbb[s], model.bbb[s]), 0.0)
        mid = jnp.maximum(conv3x3(feat, model.w3[s], model.b3[s]), 0.0)
        out = jnp.einsum("ok,bkhw->bohw", model.w1[s].astype(jnp.float32),
                         bf(mid), precision=hp)
        out = out + model.b1[s].reshape(1, -1, 1, 1)
        hms.append(out[:, 0:nc])
        whs.append(out[:, nc:nc + 1])
        regs.append(out[:, nc + 1:nc + 3])
    return hms, whs, regs


if __name__ == "__main__":
    key = jax.random.PRNGKey(0)
    B, C, H, W = 2, 4, 16, 16
    x = jax.random.normal(key, (B, C, H, W), dtype=jnp.float32)

    model = CenterNetPallas(num_stacks=2, num_classes=4, in_ch=C,
                            feat_ch=8, head_ch=16, seed=0)
    hms, whs, regs = model(x)

    for arrs in (hms, whs, regs):
        for a in arrs:
            jax.block_until_ready(a)

    assert hms[0].shape == (B, 4, H, W)
    assert whs[0].shape == (B, 1, H, W)
    assert regs[0].shape == (B, 2, H, W)
    assert len(hms) == len(whs) == len(regs) == 2

    # numerical check vs pure-JAX conv reference
    ref_hms, ref_whs, ref_regs = _reference_forward(x, model)
    for got_list, ref_list in ((hms, ref_hms), (whs, ref_whs), (regs, ref_regs)):
        for g, r in zip(got_list, ref_list):
            err = float(jnp.max(jnp.abs(g - r)))
            assert err < 3e-2, f"kernel/reference mismatch: max abs err {err}"

    print("KERNEL_OK")
</pallas_src>

<mosaic_0001>
module attributes {stable_mosaic.version = 11 : i64} {
  func.func @_centernet_stack_kernel(%arg0: i32, %arg1: memref<8x512xf32, #tpu.memory_space<vmem>>, %arg2: memref<8x512xf32, #tpu.memory_space<vmem>>, %arg3: memref<1x8x72xbf16, #tpu.memory_space<vmem>>, %arg4: memref<1x8x1xf32, #tpu.memory_space<vmem>>, %arg5: memref<1x48x72xbf16, #tpu.memory_space<vmem>>, %arg6: memref<1x48x1xf32, #tpu.memory_space<vmem>>, %arg7: memref<1x8x48xbf16, #tpu.memory_space<vmem>>, %arg8: memref<1x8x1xf32, #tpu.memory_space<vmem>>, %arg9: memref<1x8x512xf32, #tpu.memory_space<vmem>>, %arg10: memref<72x512xf32, #tpu.memory_space<vmem>>, %arg11: memref<72x512xf32, #tpu.memory_space<vmem>>) attributes {dimension_semantics = [#tpu.dimension_semantics<parallel>], iteration_bounds = array<i64: 2>, scalar_prefetch = 0 : i64, scratch_operands = 2 : i64, tpu.core_type = #tpu.core_type<tc>, window_params = [{pipeline_mode = #tpu.pipeline_mode<synchronous>, transform_indices = @transform_0, window_bounds = array<i64: 8, 512>}, {pipeline_mode = #tpu.pipeline_mode<synchronous>, transform_indices = @transform_1, window_bounds = array<i64: 8, 512>}, {transform_indices = @transform_2, window_bounds = array<i64: 1, 8, 72>}, {transform_indices = @transform_3, window_bounds = array<i64: 1, 8, 1>}, {transform_indices = @transform_4, window_bounds = array<i64: 1, 48, 72>}, {transform_indices = @transform_5, window_bounds = array<i64: 1, 48, 1>}, {transform_indices = @transform_6, window_bounds = array<i64: 1, 8, 48>}, {transform_indices = @transform_7, window_bounds = array<i64: 1, 8, 1>}, {transform_indices = @transform_8, window_bounds = array<i64: 1, 8, 512>}]} {
    %c0 = arith.constant 0 : index
    %c0_0 = arith.constant 0 : index
    %0 = vector.load %arg2[%c0, %c0_0] : memref<8x512xf32, #tpu.memory_space<vmem>>, vector<8x512xf32>
    %cst = arith.constant 5.000000e-01 : f32
    %1 = vector.broadcast %cst : f32 to vector<8x512xf32>
    %2 = arith.cmpf ogt, %0, %1 : vector<8x512xf32>
    %3 = vector.extract_strided_slice %2 {offsets = [0, 0], sizes = [1, 512], strides = [1, 1]} : vector<8x512xi1> to vector<1x512xi1>
    %4 = vector.extract_strided_slice %2 {offsets = [1, 0], sizes = [1, 512], strides = [1, 1]} : vector<8x512xi1> to vector<1x512xi1>
    %5 = vector.extract_strided_slice %2 {offsets = [2, 0], sizes = [1, 512], strides = [1, 1]} : vector<8x512xi1> to vector<1x512xi1>
    %6 = vector.extract_strided_slice %2 {offsets = [3, 0], sizes = [1, 512], strides = [1, 1]} : vector<8x512xi1> to vector<1x512xi1>
    %7 = arith.andi %3, %5 : vector<1x512xi1>
    %8 = arith.andi %3, %6 : vector<1x512xi1>
    %9 = arith.andi %4, %5 : vector<1x512xi1>
    %10 = arith.andi %4, %6 : vector<1x512xi1>
    %c0_1 = arith.constant 0 : index
    %c0_2 = arith.constant 0 : index
    %11 = vector.load %arg1[%c0_1, %c0_2] : memref<8x512xf32, #tpu.memory_space<vmem>>, vector<8x512xf32>
    %c17_i32 = arith.constant 17 : i32
    %12 = tpu.dynamic_rotate %11 by %c17_i32 dim 1 : vector<8x512xf32>, i32 -> vector<8x512xf32>
    %cst_3 = arith.constant 0.000000e+00 : f32
    %13 = vector.shape_cast %7 : vector<1x512xi1> to vector<1x512xi1>
    %14 = vector.broadcast %13 : vector<1x512xi1> to vector<8x512xi1>
    %15 = vector.broadcast %cst_3 : f32 to vector<8x512xf32>
    %16 = arith.select %14, %12, %15 : vector<8x512xi1>, vector<8x512xf32>
    %c0_4 = arith.constant 0 : index
    %c0_5 = arith.constant 0 : index
    %17 = vector.load %arg10[%c0_4, %c0_5] : memref<72x512xf32, #tpu.memory_space<vmem>>, vector<8x512xf32>
    tpu.vector_store %arg10[%c0_4, %c0_5], %16 {strides = array<i32>} : memref<72x512xf32, #tpu.memory_space<vmem>>, vector<8x512xf32>,
    %c16_i32 = arith.constant 16 : i32
    %18 = tpu.dynamic_rotate %11 by %c16_i32 dim 1 : vector<8x512xf32>, i32 -> vector<8x512xf32>
    %cst_6 = arith.constant 0.000000e+00 : f32
    %19 = vector.shape_cast %3 : vector<1x512xi1> to vector<1x512xi1>
    %20 = vector.broadcast %19 : vector<1x512xi1> to vector<8x512xi1>
    %21 = vector.broadcast %cst_6 : f32 to vector<8x512xf32>
    %22 = arith.select %20, %18, %21 : vector<8x512xi1>, vector<8x512xf32>
    %c8 = arith.constant 8 : index
    %c0_7 = arith.constant 0 : index
    %23 = vector.load %arg10[%c8, %c0_7] : memref<72x512xf32, #tpu.memory_space<vmem>>, vector<8x512xf32>
    tpu.vector_store %arg10[%c8, %c0_7], %22 {strides = array<i32>} : memref<72x512xf32, #tpu.memory_space<vmem>>, vector<8x512xf32>,
    %c15_i32 = arith.constant 15 : i32
    %24 = tpu.dynamic_rotate %11 by %c15_i32 dim 1 : vector<8x512xf32>, i32 -> vector<8x512xf32>
    %cst_8 = arith.constant 0.000000e+00 : f32
    %25 = vector.shape_cast %8 : vector<1x512xi1> to vector<1x512xi1>
    %26 = vector.broadcast %25 : vector<1x512xi1> to vector<8x512xi1>
    %27 = vector.broadcast %cst_8 : f32 to vector<8x512xf32>
    %28 = arith.select %26, %24, %27 : vector<8x512xi1>, vector<8x512xf32>
    %c16 = arith.constant 16 : index
    %c0_9 = arith.constant 0 : index
    %29 = vector.load %arg10[%c16, %c0_9] : memref<72x512xf32, #tpu.memory_space<vmem>>, vector<8x512xf32>
    tpu.vector_store %arg10[%c16, %c0_9], %28 {strides = array<i32>} : memref<72x512xf32, #tpu.memory_space<vmem>>, vector<8x512xf32>,
    %c1_i32 = arith.constant 1 : i32
    %30 = tpu.dynamic_rotate %11 by %c1_i32 dim 1 : vector<8x512xf32>, i32 -> vector<8x512xf32>
    %cst_10 = arith.constant 0.000000e+00 : f32
    %31 = vector.shape_cast %5 : vector<1x512xi1> to vector<1x512xi1>
    %32 = vector.broadcast %31 : vector<1x512xi1> to vector<8x512xi1>
    %33 = vector.broadcast %cst_10 : f32 to vector<8x512xf32>
    %34 = arith.select %32, %30, %33 : vector<8x512xi1>, vector<8x512xf32>
    %c24 = arith.constant 24 : index
    %c0_11 = arith.constant 0 : index
    %35 = vector.load %arg10[%c24, %c0_11] : memref<72x512xf32, #tpu.memory_space<vmem>>, vector<8x512xf32>
    tpu.vector_store %arg10[%c24, %c0_11], %34 {strides = array<i32>} : memref<72x512xf32, #tpu.memory_space<vmem>>, vector<8x512xf32>,
    %c32 = arith.constant 32 : index
    %c0_12 = arith.constant 0 : index
    %36 = vector.load %arg10[%c32, %c0_12] : memref<72x512xf32, #tpu.memory_space<vmem>>, vector<8x512xf32>
    tpu.vector_store %arg10[%c32, %c0_12], %11 {strides = array<i32>} : memref<72x512xf32, #tpu.memory_space<vmem>>, vector<8x512xf32>,
    %c511_i32 = arith.constant 511 : i32
    %37 = tpu.dynamic_rotate %11 by %c511_i32 dim 1 : vector<8x512xf32>, i32 -> vector<8x512xf32>
    %cst_13 = arith.constant 0.000000e+00 : f32
    %38 = vector.shape_cast %6 : vector<1x512xi1> to vector<1x512xi1>
    %39 = vector.broadcast %38 : vector<1x512xi1> to vector<8x512xi1>
    %40 = vector.broadcast %cst_13 : f32 to vector<8x512xf32>
    %41 = arith.select %39, %37, %40 : vector<8x512xi1>, vector<8x512xf32>
    %c40 = arith.constant 40 : index
    %c0_14 = arith.constant 0 : index
    %42 = vector.load %arg10[%c40, %c0_14] : memref<72x512xf32, #tpu.memory_space<vmem>>, vector<8x512xf32>
    tpu.vector_store %arg10[%c40, %c0_14], %41 {strides = array<i32>} : memref<72x512xf32, #tpu.memory_space<vmem>>, vector<8x512xf32>,
    %c497_i32 = arith.constant 497 : i32
    %43 = tpu.dynamic_rotate %11 by %c497_i32 dim 1 : vector<8x512xf32>, i32 -> vector<8x512xf32>
    %cst_15 = arith.constant 0.000000e+00 : f32
    %44 = vector.shape_cast %9 : vector<1x512xi1> to vector<1x512xi1>
    %45 = vector.broadcast %44 : vector<1x512xi1> to vector<8x512xi1>
    %46 = vector.broadcast %cst_15 : f32 to vector<8x512xf32>
    %47 = arith.select %45, %43, %46 : vector<8x512xi1>, vector<8x512xf32>
    %c48 = arith.constant 48 : index
    %c0_16 = arith.constant 0 : index
    %48 = vector.load %arg10[%c48, %c0_16] : memref<72x512xf32, #tpu.memory_space<vmem>>, vector<8x512xf32>
    tpu.vector_store %arg10[%c48, %c0_16], %47 {strides = array<i32>} : memref<72x512xf32, #tpu.memory_space<vmem>>, vector<8x512xf32>,
    %c496_i32 = arith.constant 496 : i32
    %49 = tpu.dynamic_rotate %11 by %c496_i32 dim 1 : vector<8x512xf32>, i32 -> vector<8x512xf32>
    %cst_17 = arith.constant 0.000000e+00 : f32
    %50 = vector.shape_cast %4 : vector<1x512xi1> to vector<1x512xi1>
    %51 = vector.broadcast %50 : vector<1x512xi1> to vector<8x512xi1>
    %52 = vector.broadcast %cst_17 : f32 to vector<8x512xf32>
    %53 = arith.select %51, %49, %52 : vector<8x512xi1>, vector<8x512xf32>
    %c56 = arith.constant 56 : index
    %c0_18 = arith.constant 0 : index
    %54 = vector.load %arg10[%c56, %c0_18] : memref<72x512xf32, #tpu.memory_space<vmem>>, vector<8x512xf32>
    tpu.vector_store %arg10[%c56, %c0_18], %53 {strides = array<i32>} : memref<72x512xf32, #tpu.memory_space<vmem>>, vector<8x512xf32>,
    %c495_i32 = arith.constant 495 : i32
    %55 = tpu.dynamic_rotate %11 by %c495_i32 dim 1 : vector<8x512xf32>, i32 -> vector<8x512xf32>
    %cst_19 = arith.constant 0.000000e+00 : f32
    %56 = vector.shape_cast %10 : vector<1x512xi1> to vector<1x512xi1>
    %57 = vector.broadcast %56 : vector<1x512xi1> to vector<8x512xi1>
    %58 = vector.broadcast %cst_19 : f32 to vector<8x512xf32>
    %59 = arith.select %57, %55, %58 : vector<8x512xi1>, vector<8x512xf32>
    %c64 = arith.constant 64 : index
    %c0_20 = arith.constant 0 : index
    %60 = vector.load %arg10[%c64, %c0_20] : memref<72x512xf32, #tpu.memory_space<vmem>>, vector<8x512xf32>
    tpu.vector_store %arg10[%c64, %c0_20], %59 {strides = array<i32>} : memref<72x512xf32, #tpu.memory_space<vmem>>, vector<8x512xf32>,
    %c0_21 = arith.constant 0 : index
    %c0_22 = arith.constant 0 : index
    %c0_23 = arith.constant 0 : index
    %61 = vector.load %arg3[%c0_21, %c0_22, %c0_23] : memref<1x8x72xbf16, #tpu.memory_space<vmem>>, vector<1x8x72xbf16>
    %62 = vector.shape_cast %61 : vector<1x8x72xbf16> to vector<8x72xbf16>
    %c0_24 = arith.constant 0 : index
    %c0_25 = arith.constant 0 : index
    %63 = vector.load %arg10[%c0_24, %c0_25] : memref<72x512xf32, #tpu.memory_space<vmem>>, vector<72x512xf32>
    %64 = arith.truncf %63 : vector<72x512xf32> to vector<72x512xbf16>
    %cst_26 = arith.constant dense<0.000000e+00> : vector<8x512xf32>
    %65 = tpu.matmul %62, %64, %cst_26 {dimension_numbers = #tpu.dot_dimension_numbers<[1], [0], [0], [1], [0, 0, 1, 1], [], []>} : vector<8x72xbf16>, vector<72x512xbf16>, vector<8x512xf32> -> vector<8x512xf32>
    %c0_27 = arith.constant 0 : index
    %c0_28 = arith.constant 0 : index
    %c0_29 = arith.constant 0 : index
    %66 = vector.load %arg4[%c0_27, %c0_28, %c0_29] : memref<1x8x1xf32, #tpu.memory_space<vmem>>, vector<1x8x1xf32>
    %67 = vector.shape_cast %66 : vector<1x8x1xf32> to vector<8x1xf32>
    %68 = vector.broadcast %67 : vector<8x1xf32> to vector<8x512xf32>
    %69 = arith.addf %65, %68 : vector<8x512xf32>
    %cst_30 = arith.constant 0.000000e+00 : f32
    %70 = vector.broadcast %cst_30 : f32 to vector<8x512xf32>
    %71 = arith.maximumf %69, %70 : vector<8x512xf32>
    %c17_i32_31 = arith.constant 17 : i32
    %72 = tpu.dynamic_rotate %71 by %c17_i32_31 dim 1 : vector<8x512xf32>, i32 -> vector<8x512xf32>
    %cst_32 = arith.constant 0.000000e+00 : f32
    %73 = vector.shape_cast %7 : vector<1x512xi1> to vector<1x512xi1>
    %74 = vector.broadcast %73 : vector<1x512xi1> to vector<8x512xi1>
    %75 = vector.broadcast %cst_32 : f32 to vector<8x512xf32>
    %76 = arith.select %74, %72, %75 : vector<8x512xi1>, vector<8x512xf32>
    %c0_33 = arith.constant 0 : index
    %c0_34 = arith.constant 0 : index
    %77 = vector.load %arg11[%c0_33, %c0_34] : memref<72x512xf32, #tpu.memory_space<vmem>>, vector<8x512xf32>
    tpu.vector_store %arg11[%c0_33, %c0_34], %76 {strides = array<i32>} : memref<72x512xf32, #tpu.memory_space<vmem>>, vector<8x512xf32>,
    %c16_i32_35 = arith.constant 16 : i32
    %78 = tpu.dynamic_rotate %71 by %c16_i32_35 dim 1 : vector<8x512xf32>, i32 -> vector<8x512xf32>
    %cst_36 = arith.constant 0.000000e+00 : f32
    %79 = vector.shape_cast %3 : vector<1x512xi1> to vector<1x512xi1>
    %80 = vector.broadcast %79 : vector<1x512xi1> to vector<8x512xi1>
    %81 = vector.broadcast %cst_36 : f32 to vector<8x512xf32>
    %82 = arith.select %80, %78, %81 : vector<8x512xi1>, vector<8x512xf32>
    %c8_37 = arith.constant 8 : index
    %c0_38 = arith.constant 0 : index
    %83 = vector.load %arg11[%c8_37, %c0_38] : memref<72x512xf32, #tpu.memory_space<vmem>>, vector<8x512xf32>
    tpu.vector_store %arg11[%c8_37, %c0_38], %82 {strides = array<i32>} : memref<72x512xf32, #tpu.memory_space<vmem>>, vector<8x512xf32>,
    %c15_i32_39 = arith.constant 15 : i32
    %84 = tpu.dynamic_rotate %71 by %c15_i32_39 dim 1 : vector<8x512xf32>, i32 -> vector<8x512xf32>
    %cst_40 = arith.constant 0.000000e+00 : f32
    %85 = vector.shape_cast %8 : vector<1x512xi1> to vector<1x512xi1>
    %86 = vector.broadcast %85 : vector<1x512xi1> to vector<8x512xi1>
    %87 = vector.broadcast %cst_40 : f32 to vector<8x512xf32>
    %88 = arith.select %86, %84, %87 : vector<8x512xi1>, vector<8x512xf32>
    %c16_41 = arith.constant 16 : index
    %c0_42 = arith.constant 0 : index
    %89 = vector.load %arg11[%c16_41, %c0_42] : memref<72x512xf32, #tpu.memory_space<vmem>>, vector<8x512xf32>
    tpu.vector_store %arg11[%c16_41, %c0_42], %88 {strides = array<i32>} : memref<72x512xf32, #tpu.memory_space<vmem>>, vector<8x512xf32>,
    %c1_i32_43 = arith.constant 1 : i32
    %90 = tpu.dynamic_rotate %71 by %c1_i32_43 dim 1 : vector<8x512xf32>, i32 -> vector<8x512xf32>
    %cst_44 = arith.constant 0.000000e+00 : f32
    %91 = vector.shape_cast %5 : vector<1x512xi1> to vector<1x512xi1>
    %92 = vector.broadcast %91 : vector<1x512xi1> to vector<8x512xi1>
    %93 = vector.broadcast %cst_44 : f32 to vector<8x512xf32>
    %94 = arith.select %92, %90, %93 : vector<8x512xi1>, vector<8x512xf32>
    %c24_45 = arith.constant 24 : index
    %c0_46 = arith.constant 0 : index
    %95 = vector.load %arg11[%c24_45, %c0_46] : memref<72x512xf32, #tpu.memory_space<vmem>>, vector<8x512xf32>
    tpu.vector_store %arg11[%c24_45, %c0_46], %94 {strides = array<i32>} : memref<72x512xf32, #tpu.memory_space<vmem>>, vector<8x512xf32>,
    %c32_47 = arith.constant 32 : index
    %c0_48 = arith.constant 0 : index
    %96 = vector.load %arg11[%c32_47, %c0_48] : memref<72x512xf32, #tpu.memory_space<vmem>>, vector<8x512xf32>
    tpu.vector_store %arg11[%c32_47, %c0_48], %71 {strides = array<i32>} : memref<72x512xf32, #tpu.memory_space<vmem>>, vector<8x512xf32>,
    %c511_i32_49 = arith.constant 511 : i32
    %97 = tpu.dynamic_rotate %71 by %c511_i32_49 dim 1 : vector<8x512xf32>, i32 -> vector<8x512xf32>
    %cst_50 = arith.constant 0.000000e+00 : f32
    %98 = vector.shape_cast %6 : vector<1x512xi1> to vector<1x512xi1>
    %99 = vector.broadcast %98 : vector<1x512xi1> to vector<8x512xi1>
    %100 = vector.broadcast %cst_50 : f32 to vector<8x512xf32>
    %101 = arith.select %99, %97, %100 : vector<8x512xi1>, vector<8x512xf32>
    %c40_51 = arith.constant 40 : index
    %c0_52 = arith.constant 0 : index
    %102 = vector.load %arg11[%c40_51, %c0_52] : memref<72x512xf32, #tpu.memory_space<vmem>>, vector<8x512xf32>
    tpu.vector_store %arg11[%c40_51, %c0_52], %101 {strides = array<i32>} : memref<72x512xf32, #tpu.memory_space<vmem>>, vector<8x512xf32>,
    %c497_i32_53 = arith.constant 497 : i32
    %103 = tpu.dynamic_rotate %71 by %c497_i32_53 dim 1 : vector<8x512xf32>, i32 -> vector<8x512xf32>
    %cst_54 = arith.constant 0.000000e+00 : f32
    %104 = vector.shape_cast %9 : vector<1x512xi1> to vector<1x512xi1>
    %105 = vector.broadcast %104 : vector<1x512xi1> to vector<8x512xi1>
    %106 = vector.broadcast %cst_54 : f32 to vector<8x512xf32>
    %107 = arith.select %105, %103, %106 : vector<8x512xi1>, vector<8x512xf32>
    %c48_55 = arith.constant 48 : index
    %c0_56 = arith.constant 0 : index
    %108 = vector.load %arg11[%c48_55, %c0_56] : memref<72x512xf32, #tpu.memory_space<vmem>>, vector<8x512xf32>
    tpu.vector_store %arg11[%c48_55, %c0_56], %107 {strides = array<i32>} : memref<72x512xf32, #tpu.memory_space<vmem>>, vector<8x512xf32>,
    %c496_i32_57 = arith.constant 496 : i32
    %109 = tpu.dynamic_rotate %71 by %c496_i32_57 dim 1 : vector<8x512xf32>, i32 -> vector<8x512xf32>
    %cst_58 = arith.constant 0.000000e+00 : f32
    %110 = vector.shape_cast %4 : vector<1x512xi1> to vector<1x512xi1>
    %111 = vector.broadcast %110 : vector<1x512xi1> to vector<8x512xi1>
    %112 = vector.broadcast %cst_58 : f32 to vector<8x512xf32>
    %113 = arith.select %111, %109, %112 : vector<8x512xi1>, vector<8x512xf32>
    %c56_59 = arith.constant 56 : index
    %c0_60 = arith.constant 0 : index
    %114 = vector.load %arg11[%c56_59, %c0_60] : memref<72x512xf32, #tpu.memory_space<vmem>>, vector<8x512xf32>
    tpu.vector_store %arg11[%c56_59, %c0_60], %113 {strides = array<i32>} : memref<72x512xf32, #tpu.memory_space<vmem>>, vector<8x512xf32>,
    %c495_i32_61 = arith.constant 495 : i32
    %115 = tpu.dynamic_rotate %71 by %c495_i32_61 dim 1 : vector<8x512xf32>, i32 -> vector<8x512xf32>
    %cst_62 = arith.constant 0.000000e+00 : f32
    %116 = vector.shape_cast %10 : vector<1x512xi1> to vector<1x512xi1>
    %117 = vector.broadcast %116 : vector<1x512xi1> to vector<8x512xi1>
    %118 = vector.broadcast %cst_62 : f32 to vector<8x512xf32>
    %119 = arith.select %117, %115, %118 : vector<8x512xi1>, vector<8x512xf32>
    %c64_63 = arith.constant 64 : index
    %c0_64 = arith.constant 0 : index
    %120 = vector.load %arg11[%c64_63, %c0_64] : memref<72x512xf32, #tpu.memory_space<vmem>>, vector<8x512xf32>
    tpu.vector_store %arg11[%c64_63, %c0_64], %119 {strides = array<i32>} : memref<72x512xf32, #tpu.memory_space<vmem>>, vector<8x512xf32>,
    %c0_65 = arith.constant 0 : index
    %c0_66 = arith.constant 0 : index
    %c0_67 = arith.constant 0 : index
    %121 = vector.load %arg5[%c0_65, %c0_66, %c0_67] : memref<1x48x72xbf16, #tpu.memory_space<vmem>>, vector<1x48x72xbf16>
    %122 = vector.shape_cast %121 : vector<1x48x72xbf16> to vector<48x72xbf16>
    %c0_68 = arith.constant 0 : index
    %c0_69 = arith.constant 0 : index
    %123 = vector.load %arg11[%c0_68, %c0_69] : memref<72x512xf32, #tpu.memory_space<vmem>>, vector<72x512xf32>
    %124 = arith.truncf %123 : vector<72x512xf32> to vector<72x512xbf16>
    %cst_70 = arith.constant dense<0.000000e+00> : vector<48x512xf32>
    %125 = tpu.matmul %122, %124, %cst_70 {dimension_numbers = #tpu.dot_dimension_numbers<[1], [0], [0], [1], [0, 0, 1, 1], [], []>} : vector<48x72xbf16>, vector<72x512xbf16>, vector<48x512xf32> -> vector<48x512xf32>
    %c0_71 = arith.constant 0 : index
    %c0_72 = arith.constant 0 : index
    %c0_73 = arith.constant 0 : index
    %126 = vector.load %arg6[%c0_71, %c0_72, %c0_73] : memref<1x48x1xf32, #tpu.memory_space<vmem>>, vector<1x48x1xf32>
    %127 = vector.shape_cast %126 : vector<1x48x1xf32> to vector<48x1xf32>
    %128 = vector.broadcast %127 : vector<48x1xf32> to vector<48x512xf32>
    %129 = arith.addf %125, %128 : vector<48x512xf32>
    %cst_74 = arith.constant 0.000000e+00 : f32
    %130 = vector.broadcast %cst_74 : f32 to vector<48x512xf32>
    %131 = arith.maximumf %129, %130 : vector<48x512xf32>
    %c0_75 = arith.constant 0 : index
    %c0_76 = arith.constant 0 : index
    %c0_77 = arith.constant 0 : index
    %132 = vector.load %arg7[%c0_75, %c0_76, %c0_77] : memref<1x8x48xbf16, #tpu.memory_space<vmem>>, vector<1x8x48xbf16>
    %133 = vector.shape_cast %132 : vector<1x8x48xbf16> to vector<8x48xbf16>
    %134 = arith.truncf %131 : vector<48x512xf32> to vector<48x512xbf16>
    %cst_78 = arith.constant dense<0.000000e+00> : vector<8x512xf32>
    %135 = tpu.matmul %133, %134, %cst_78 {dimension_numbers = #tpu.dot_dimension_numbers<[1], [0], [0], [1], [0, 0, 1, 1], [], []>} : vector<8x48xbf16>, vector<48x512xbf16>, vector<8x512xf32> -> vector<8x512xf32>
    %c0_79 = arith.constant 0 : index
    %c0_80 = arith.constant 0 : index
    %c0_81 = arith.constant 0 : index
    %136 = vector.load %arg8[%c0_79, %c0_80, %c0_81] : memref<1x8x1xf32, #tpu.memory_space<vmem>>, vector<1x8x1xf32>
    %137 = vector.shape_cast %136 : vector<1x8x1xf32> to vector<8x1xf32>
    %138 = vector.broadcast %137 : vector<8x1xf32> to vector<8x512xf32>
    %139 = arith.addf %135, %138 : vector<8x512xf32>
    %c0_82 = arith.constant 0 : index
    %c0_83 = arith.constant 0 : index
    %c0_84 = arith.constant 0 : index
    %140 = vector.load %arg9[%c0_82, %c0_83, %c0_84] : memref<1x8x512xf32, #tpu.memory_space<vmem>>, vector<1x8x512xf32>
    %141 = vector.shape_cast %140 : vector<1x8x512xf32> to vector<8x512xf32>
    %142 = vector.shape_cast %139 : vector<8x512xf32> to vector<1x8x512xf32>
    tpu.vector_store %arg9[%c0_82, %c0_83, %c0_84], %142 {strides = array<i32>} : memref<1x8x512xf32, #tpu.memory_space<vmem>>, vector<1x8x512xf32>,
    return
  }
  func.func @transform_0(%arg0: i32) -> (i32, i32) {
    %c0_i32 = arith.constant 0 : i32
    %c0_i32_0 = arith.constant 0 : i32
    %c0_i32_1 = arith.constant 0 : i32
    return %c0_i32, %c0_i32_0 : i32, i32
  }
  func.func @transform_1(%arg0: i32) -> (i32, i32) {
    %c0_i32 = arith.constant 0 : i32
    %c0_i32_0 = arith.constant 0 : i32
    %c0_i32_1 = arith.constant 0 : i32
    return %c0_i32, %c0_i32_0 : i32, i32
  }
  func.func @transform_2(%arg0: i32) -> (i32, i32, i32) {
    %c0_i32 = arith.constant 0 : i32
    %c0_i32_0 = arith.constant 0 : i32
    %c0_i32_1 = arith.constant 0 : i32
    return %arg0, %c0_i32, %c0_i32_0 : i32, i32, i32
  }
  func.func @transform_3(%arg0: i32) -> (i32, i32, i32) {
    %c0_i32 = arith.constant 0 : i32
    %c0_i32_0 = arith.constant 0 : i32
    %c0_i32_1 = arith.constant 0 : i32
    return %arg0, %c0_i32, %c0_i32_0 : i32, i32, i32
  }
  func.func @transform_4(%arg0: i32) -> (i32, i32, i32) {
    %c0_i32 = arith.constant 0 : i32
    %c0_i32_0 = arith.constant 0 : i32
    %c0_i32_1 = arith.constant 0 : i32
    return %arg0, %c0_i32, %c0_i32_0 : i32, i32, i32
  }
  func.func @transform_5(%arg0: i32) -> (i32, i32, i32) {
    %c0_i32 = arith.constant 0 : i32
    %c0_i32_0 = arith.constant 0 : i32
    %c0_i32_1 = arith.constant 0 : i32
    return %arg0, %c0_i32, %c0_i32_0 : i32, i32, i32
  }
  func.func @transform_6(%arg0: i32) -> (i32, i32, i32) {
    %c0_i32 = arith.constant 0 : i32
    %c0_i32_0 = arith.constant 0 : i32
    %c0_i32_1 = arith.constant 0 : i32
    return %arg0, %c0_i32, %c0_i32_0 : i32, i32, i32
  }
  func.func @transform_7(%arg0: i32) -> (i32, i32, i32) {
    %c0_i32 = arith.constant 0 : i32
    %c0_i32_0 = arith.constant 0 : i32
    %c0_i32_1 = arith.constant 0 : i32
    return %arg0, %c0_i32, %c0_i32_0 : i32, i32, i32
  }
  func.func @transform_8(%arg0: i32) -> (i32, i32, i32) {
    %c0_i32 = arith.constant 0 : i32
    %c0_i32_0 = arith.constant 0 : i32
    %c0_i32_1 = arith.constant 0 : i32
    return %arg0, %c0_i32, %c0_i32_0 : i32, i32, i32
  }
}

</mosaic_0001>

<llo_original>
// kernel: tpu_custom_call.1
$region0: #{tpu_custom_call.1}
  #allocation0 [shape = 'u32[]', space=smem, size = 0x4, offset = 0x4, fixed_abs, tag = 'smem constant byte address 0x4 - core index']
  #allocation1 [shape = 'u32[144,128]{1,0:T(1,128)}', space=vmem, size = 0x12000, scoped, tag = 'internal scratch']
  #allocation2 [shape = 'f32[72,512]{1,0:T(8,128)}', space=vmem, size = 0x24000, scoped, tag = 'scratch operand']
  #allocation3 [shape = 'f32[72,512]{1,0:T(8,128)}', space=vmem, size = 0x24000, scoped, tag = 'scratch operand']
  %s0 = inlined_call_operand.vmem [shape: f32[8,512], index: 0, kind: input, shape index: {}]
  %s1 = inlined_call_operand.vmem [shape: f32[8,512], index: 1, kind: input, shape index: {}]
  %s2 = inlined_call_operand.vmem [shape: bf16[2,8,72], index: 2, kind: input, shape index: {}]
  %s3 = inlined_call_operand.vmem [shape: f32[2,8,1], index: 3, kind: input, shape index: {}]
  %s4 = inlined_call_operand.vmem [shape: bf16[2,48,72], index: 4, kind: input, shape index: {}]
  %s5 = inlined_call_operand.vmem [shape: f32[2,48,1], index: 5, kind: input, shape index: {}]
  %s6 = inlined_call_operand.vmem [shape: bf16[2,8,48], index: 6, kind: input, shape index: {}]
  %s7 = inlined_call_operand.vmem [shape: f32[2,8,1], index: 7, kind: input, shape index: {}]
  %s8 = inlined_call_operand.hbm [shape: f32[2,8,512], index: 8, kind: output, shape index: {}]
  %s9 = sld [smem:[#allocation0]]
  $region65: #{tpu_custom_call.1} parent=0
    _
  %s11 = ssub.s32 1, %s9
  %s12 = scalar_select 0, %s11, %s9
  $region1: #{tpu_custom_call.1} parent=0
    #allocation4 [shape = 'u8[32768]{0}', space=vmem, size = 0x8000, scoped, tag = 'output window, operand 0']
    #allocation5 [shape = 's32[2]{0}', space=sflag, size = 0x8, scoped, tag = 'scoped memory for tpu_custom_call.1']
    %13 = vsyncpa [#allocation5], 0
    %s14 = scalar_lea.sflag [#allocation5], 1
    %15 = vsyncpa %s14, 0
    loop: start=0, step=1, limit=4
    $region2: #{tpu_custom_call.1} parent=1 // loop_pre_header
      _
    $region3: #{tpu_custom_call.1} parent=1 // loop_header
      %s17 = sphi 0, %s21
      %p18 = scmp.ge.s32.totalorder %s17, 4
      %s25 = sphi 0, %s25
      %s27 = sphi 0, %s25
      %s28 = sphi 0, %s27
      %s42 = sphi 0, %s28
      %s46 = sphi 0, %s46
      %s48 = sphi 0, %s46
      %s49 = sphi 0, %s48
      %s63 = sphi 0, %s49
      %s69 = sphi 0, %s71
      %s72 = sphi 0, %s69
      %s73 = sphi 0, %s72
      %s89 = sphi 0, %s73
      %s95 = sphi 0, %s97
      %s98 = sphi 0, %s95
      %s99 = sphi 0, %s98
      %s115 = sphi 0, %s99
      %s121 = sphi 0, %s123
      %s124 = sphi 0, %s121
      %s125 = sphi 0, %s124
      %s141 = sphi 0, %s125
      %s147 = sphi 0, %s149
      %s150 = sphi 0, %s147
      %s151 = sphi 0, %s150
      %s167 = sphi 0, %s151
      %s173 = sphi 0, %s175
      %s176 = sphi 0, %s173
      %s177 = sphi 0, %s176
      %s193 = sphi 0, %s177
      %s199 = sphi 0, %s201
      %s202 = sphi 0, %s199
      %s203 = sphi 0, %s202
      %s219 = sphi 0, %s203
      %s225 = sphi 0, %s227
      %s228 = sphi 0, %s225
      %s229 = sphi 0, %s228
      %s245 = sphi 0, %s229
    $region4: #{tpu_custom_call.1} parent=1 // loop_header_branch
      %20 = sbr.rel (%p18) target = $region8
    $region5: #{tpu_custom_call.1} parent=1 // loop_body
      %s22 = ssub.s32 %s17, 1
      %s23 = ssub.s32 %s17, 2
      %s24 = sadd.s32 %s17, 1
      %s26 = sadd.s32 %s25, 1
      %p29 = scmp.eq.s32.totalorder %s17, 1
      %p30 = scmp.ne.s32.totalorder %s25, %s27
      %p31 = scmp.eq.s32.totalorder %s17, 0
      %p32 = por %p30, %p31
      %p33 = scmp.ne.s32.totalorder %s25, %s27
      %p34 = scmp.eq.s32.totalorder %s22, 1
      %p35 = por %p33, %p34
      %p36 = scmp.ne.s32.totalorder %s27, %s28
      %p37 = scmp.eq.s32.totalorder %s22, 0
      %p38 = por %p36, %p37
      %p39 = scmp.ne.s32.totalorder %s27, %s28
      %p40 = scmp.eq.s32.totalorder %s23, 1
      %p41 = por %p39, %p40
      %p43 = scmp.ne.s32.totalorder %s28, %s42
      %p44 = scmp.eq.s32.totalorder %s23, 0
      %p45 = por %p43, %p44
      %s47 = sadd.s32 %s46, 1
      %p50 = scmp.eq.s32.totalorder %s17, 1
      %p51 = scmp.ne.s32.totalorder %s46, %s48
      %p52 = scmp.eq.s32.totalorder %s17, 0
      %p53 = por %p51, %p52
      %p54 = scmp.ne.s32.totalorder %s46, %s48
      %p55 = scmp.eq.s32.totalorder %s22, 1
      %p56 = por %p54, %p55
      %p57 = scmp.ne.s32.totalorder %s48, %s49
      %p58 = scmp.eq.s32.totalorder %s22, 0
      %p59 = por %p57, %p58
      %p60 = scmp.ne.s32.totalorder %s48, %s49
      %p61 = scmp.eq.s32.totalorder %s23, 1
      %p62 = por %p60, %p61
      %p64 = scmp.ne.s32.totalorder %s49, %s63
      %p65 = scmp.eq.s32.totalorder %s23, 0
      %p66 = por %p64, %p65
      %s67 = ssub.s32 %s17, %s24
      %p68 = scmp.eq.s32.totalorder %s67, 0
      %s70 = sadd.s32 %s69, 1
      %s71 = scalar_select %p68, %s69, %s70
      %p74 = pneg %p68
      %p75 = scmp.eq.s32.totalorder %s17, 1
      %p76 = por %p74, %p75
      %p77 = scmp.ne.s32.totalorder %s69, %s72
      %p78 = scmp.eq.s32.totalorder %s17, 0
      %p79 = por %p77, %p78
      %p80 = scmp.ne.s32.totalorder %s69, %s72
      %p81 = scmp.eq.s32.totalorder %s22, 1
      %p82 = por %p80, %p81
      %p83 = scmp.ne.s32.totalorder %s72, %s73
      %p84 = scmp.eq.s32.totalorder %s22, 0
      %p85 = por %p83, %p84
      %p86 = scmp.ne.s32.totalorder %s72, %s73
      %p87 = scmp.eq.s32.totalorder %s23, 1
      %p88 = por %p86, %p87
      %p90 = scmp.ne.s32.totalorder %s73, %s89
      %p91 = scmp.eq.s32.totalorder %s23, 0
      %p92 = por %p90, %p91
      %s93 = ssub.s32 %s17, %s24
      %p94 = scmp.eq.s32.totalorder %s93, 0
      %s96 = sadd.s32 %s95, 1
      %s97 = scalar_select %p94, %s95, %s96
      %p100 = pneg %p94
      %p101 = scmp.eq.s32.totalorder %s17, 1
      %p102 = por %p100, %p101
      %p103 = scmp.ne.s32.totalorder %s95, %s98
      %p104 = scmp.eq.s32.totalorder %s17, 0
      %p105 = por %p103, %p104
      %p106 = scmp.ne.s32.totalorder %s95, %s98
      %p107 = scmp.eq.s32.totalorder %s22, 1
      %p108 = por %p106, %p107
      %p109 = scmp.ne.s32.totalorder %s98, %s99
      %p110 = scmp.eq.s32.totalorder %s22, 0
      %p111 = por %p109, %p110
      %p112 = scmp.ne.s32.totalorder %s98, %s99
      %p113 = scmp.eq.s32.totalorder %s23, 1
      %p114 = por %p112, %p113
      %p116 = scmp.ne.s32.totalorder %s99, %s115
      %p117 = scmp.eq.s32.totalorder %s23, 0
      %p118 = por %p116, %p117
      %s119 = ssub.s32 %s17, %s24
      %p120 = scmp.eq.s32.totalorder %s119, 0
      %s122 = sadd.s32 %s121, 1
      %s123 = scalar_select %p120, %s121, %s122
      %p126 = pneg %p120
      %p127 = scmp.eq.s32.totalorder %s17, 1
      %p128 = por %p126, %p127
      %p129 = scmp.ne.s32.totalorder %s121, %s124
      %p130 = scmp.eq.s32.totalorder %s17, 0
      %p131 = por %p129, %p130
      %p132 = scmp.ne.s32.totalorder %s121, %s124
      %p133 = scmp.eq.s32.totalorder %s22, 1
      %p134 = por %p132, %p133
      %p135 = scmp.ne.s32.totalorder %s124, %s125
      %p136 = scmp.eq.s32.totalorder %s22, 0
      %p137 = por %p135, %p136
      %p138 = scmp.ne.s32.totalorder %s124, %s125
      %p139 = scmp.eq.s32.totalorder %s23, 1
      %p140 = por %p138, %p139
      %p142 = scmp.ne.s32.totalorder %s125, %s141
      %p143 = scmp.eq.s32.totalorder %s23, 0
      %p144 = por %p142, %p143
      %s145 = ssub.s32 %s17, %s24
      %p146 = scmp.eq.s32.totalorder %s145, 0
      %s148 = sadd.s32 %s147, 1
      %s149 = scalar_select %p146, %s147, %s148
      %p152 = pneg %p146
      %p153 = scmp.eq.s32.totalorder %s17, 1
      %p154 = por %p152, %p153
      %p155 = scmp.ne.s32.totalorder %s147, %s150
      %p156 = scmp.eq.s32.totalorder %s17, 0
      %p157 = por %p155, %p156
      %p158 = scmp.ne.s32.totalorder %s147, %s150
      %p159 = scmp.eq.s32.totalorder %s22, 1
      %p160 = por %p158, %p159
      %p161 = scmp.ne.s32.totalorder %s150, %s151
      %p162 = scmp.eq.s32.totalorder %s22, 0
      %p163 = por %p161, %p162
      %p164 = scmp.ne.s32.totalorder %s150, %s151
      %p165 = scmp.eq.s32.totalorder %s23, 1
      %p166 = por %p164, %p165
      %p168 = scmp.ne.s32.totalorder %s151, %s167
      %p169 = scmp.eq.s32.totalorder %s23, 0
      %p170 = por %p168, %p169
      %s171 = ssub.s32 %s17, %s24
      %p172 = scmp.eq.s32.totalorder %s171, 0
      %s174 = sadd.s32 %s173, 1
      %s175 = scalar_select %p172, %s173, %s174
      %p178 = pneg %p172
      %p179 = scmp.eq.s32.totalorder %s17, 1
      %p180 = por %p178, %p179
      %p181 = scmp.ne.s32.totalorder %s173, %s176
      %p182 = scmp.eq.s32.totalorder %s17, 0
      %p183 = por %p181, %p182
      %p184 = scmp.ne.s32.totalorder %s173, %s176
      %p185 = scmp.eq.s32.totalorder %s22, 1
      %p186 = por %p184, %p185
      %p187 = scmp.ne.s32.totalorder %s176, %s177
      %p188 = scmp.eq.s32.totalorder %s22, 0
      %p189 = por %p187, %p188
      %p190 = scmp.ne.s32.totalorder %s176, %s177
      %p191 = scmp.eq.s32.totalorder %s23, 1
      %p192 = por %p190, %p191
      %p194 = scmp.ne.s32.totalorder %s177, %s193
      %p195 = scmp.eq.s32.totalorder %s23, 0
      %p196 = por %p194, %p195
      %s197 = ssub.s32 %s17, %s24
      %p198 = scmp.eq.s32.totalorder %s197, 0
      %s200 = sadd.s32 %s199, 1
      %s201 = scalar_select %p198, %s199, %s200
      %p204 = pneg %p198
      %p205 = scmp.eq.s32.totalorder %s17, 1
      %p206 = por %p204, %p205
      %p207 = scmp.ne.s32.totalorder %s199, %s202
      %p208 = scmp.eq.s32.totalorder %s17, 0
      %p209 = por %p207, %p208
      %p210 = scmp.ne.s32.totalorder %s199, %s202
      %p211 = scmp.eq.s32.totalorder %s22, 1
      %p212 = por %p210, %p211
      %p213 = scmp.ne.s32.totalorder %s202, %s203
      %p214 = scmp.eq.s32.totalorder %s22, 0
      %p215 = por %p213, %p214
      %p216 = scmp.ne.s32.totalorder %s202, %s203
      %p217 = scmp.eq.s32.totalorder %s23, 1
      %p218 = por %p216, %p217
      %p220 = scmp.ne.s32.totalorder %s203, %s219
      %p221 = scmp.eq.s32.totalorder %s23, 0
      %p222 = por %p220, %p221
      %s223 = ssub.s32 %s17, %s24
      %p224 = scmp.eq.s32.totalorder %s223, 0
      %s226 = sadd.s32 %s225, 1
      %s227 = scalar_select %p224, %s225, %s226
      %p230 = pneg %p224
      %p231 = scmp.eq.s32.totalorder %s17, 1
      %p232 = por %p230, %p231
      %p233 = scmp.ne.s32.totalorder %s225, %s228
      %p234 = scmp.eq.s32.totalorder %s17, 0
      %p235 = por %p233, %p234
      %p236 = scmp.ne.s32.totalorder %s225, %s228
      %p237 = scmp.eq.s32.totalorder %s22, 1
      %p238 = por %p236, %p237
      %p239 = scmp.ne.s32.totalorder %s228, %s229
      %p240 = scmp.eq.s32.totalorder %s22, 0
      %p241 = por %p239, %p240
      %p242 = scmp.ne.s32.totalorder %s228, %s229
      %p243 = scmp.eq.s32.totalorder %s23, 1
      %p244 = por %p242, %p243
      %p246 = scmp.ne.s32.totalorder %s229, %s245
      %p247 = scmp.eq.s32.totalorder %s23, 0
      %p248 = por %p246, %p247
      %p249 = scmp.le.s32.totalorder 1, %s17
      %p250 = scmp.lt.s32.totalorder %s17, 3
      %p251 = pnand %p249, %p250
      %p252 = pneg %p251
      // Predicated region
      $region9: #{tpu_custom_call.1} parent=5 // pred_check
        _
      $region10: #{tpu_custom_call.1} parent=5 // pred_check_branch
        %254 = sbr.rel (%p251) target = $region12
      $region11: #{tpu_custom_call.1} parent=5 // pred_region
        %s255 = ssub.s32 %s17, 1
        // Predicated region
        $region13: #{tpu_custom_call.1} parent=11 // pred_check
          %p256 = pneg %p38
        $region14: #{tpu_custom_call.1} parent=11 // pred_check_branch
          %258 = sbr.rel (%p256) target = $region16
        $region15: #{tpu_custom_call.1} parent=11 // pred_region
          _
        $region16: #{tpu_custom_call.1} parent=11 // pred_fallthru
          _
        // Predicated region
        $region17: #{tpu_custom_call.1} parent=11 // pred_check
          %p259 = pneg %p59
        $region18: #{tpu_custom_call.1} parent=11 // pred_check_branch
          %261 = sbr.rel (%p259) target = $region20
        $region19: #{tpu_custom_call.1} parent=11 // pred_region
          _
        $region20: #{tpu_custom_call.1} parent=11 // pred_fallthru
          _
      $region12: #{tpu_custom_call.1} parent=5 // pred_fallthru
        _
      %p262 = scmp.lt.s32.totalorder %s17, 2
      // Predicated region
      $region21: #{tpu_custom_call.1} parent=5 // pred_check
        %p263 = pneg %p262
      $region22: #{tpu_custom_call.1} parent=5 // pred_check_branch
        %265 = sbr.rel (%p263) target = $region24
      $region23: #{tpu_custom_call.1} parent=5 // pred_region
        // Predicated region
        $region25: #{tpu_custom_call.1} parent=23 // pred_check
          %p266 = pneg %p79
        $region26: #{tpu_custom_call.1} parent=23 // pred_check_branch
          %268 = sbr.rel (%p266) target = $region28
        $region27: #{tpu_custom_call.1} parent=23 // pred_region
          %p269 = scmp.lt.s32.totalorder %s17, 1
          %s270 = scalar_select %p269, %s17, 1
          %s271 = smul.addr %s270, 4
          %s272 = scalar_lea.vmem %s2, %s271
        $region28: #{tpu_custom_call.1} parent=23 // pred_fallthru
          _
        // Predicated region
        $region29: #{tpu_custom_call.1} parent=23 // pred_check
          %p273 = pneg %p105
        $region30: #{tpu_custom_call.1} parent=23 // pred_check_branch
          %275 = sbr.rel (%p273) target = $region32
        $region31: #{tpu_custom_call.1} parent=23 // pred_region
          %p276 = scmp.lt.s32.totalorder %s17, 1
          %s277 = scalar_select %p276, %s17, 1
          %s278 = smul.addr %s277, 8
          %s279 = scalar_lea.vmem %s3, %s278
        $region32: #{tpu_custom_call.1} parent=23 // pred_fallthru
          _
        // Predicated region
        $region33: #{tpu_custom_call.1} parent=23 // pred_check
          %p280 = pneg %p131
        $region34: #{tpu_custom_call.1} parent=23 // pred_check_branch
          %282 = sbr.rel (%p280) target = $region36
        $region35: #{tpu_custom_call.1} parent=23 // pred_region
          %p283 = scmp.lt.s32.totalorder %s17, 1
          %s284 = scalar_select %p283, %s17, 1
          %s285 = smul.addr %s284, 6
          %s286 = smul.addr %s285, 4
          %s287 = scalar_lea.vmem %s4, %s286
        $region36: #{tpu_custom_call.1} parent=23 // pred_fallthru
          _
        // Predicated region
        $region37: #{tpu_custom_call.1} parent=23 // pred_check
          %p288 = pneg %p157
        $region38: #{tpu_custom_call.1} parent=23 // pred_check_branch
          %290 = sbr.rel (%p288) target = $region40
        $region39: #{tpu_custom_call.1} parent=23 // pred_region
          %p291 = scmp.lt.s32.totalorder %s17, 1
          %s292 = scalar_select %p291, %s17, 1
          %s293 = smul.addr %s292, 6
          %s294 = smul.addr %s293, 8
          %s295 = scalar_lea.vmem %s5, %s294
        $region40: #{tpu_custom_call.1} parent=23 // pred_fallthru
          _
        // Predicated region
        $region41: #{tpu_custom_call.1} parent=23 // pred_check
          %p296 = pneg %p183
        $region42: #{tpu_custom_call.1} parent=23 // pred_check_branch
          %298 = sbr.rel (%p296) target = $region44
        $region43: #{tpu_custom_call.1} parent=23 // pred_region
          %p299 = scmp.lt.s32.totalorder %s17, 1
          %s300 = scalar_select %p299, %s17, 1
          %s301 = smul.addr %s300, 4
          %s302 = scalar_lea.vmem %s6, %s301
        $region44: #{tpu_custom_call.1} parent=23 // pred_fallthru
          _
        // Predicated region
        $region45: #{tpu_custom_call.1} parent=23 // pred_check
          %p303 = pneg %p209
        $region46: #{tpu_custom_call.1} parent=23 // pred_check_branch
          %305 = sbr.rel (%p303) target = $region48
        $region47: #{tpu_custom_call.1} parent=23 // pred_region
          %p306 = scmp.lt.s32.totalorder %s17, 1
          %s307 = scalar_select %p306, %s17, 1
          %s308 = smul.addr %s307, 8
          %s309 = scalar_lea.vmem %s7, %s308
        $region48: #{tpu_custom_call.1} parent=23 // pred_fallthru
          _
      $region24: #{tpu_custom_call.1} parent=5 // pred_fallthru
        _
      %p310 = scmp.le.s32.totalorder 1, %s17
      %p311 = scmp.lt.s32.totalorder %s17, 3
      %p312 = pnand %p310, %p311
      %p313 = pneg %p312
      // Predicated region
      $region49: #{tpu_custom_call.1} parent=5 // pred_check
        _
      $region50: #{tpu_custom_call.1} parent=5 // pred_check_branch
        %315 = sbr.rel (%p312) target = $region52
      $region51: #{tpu_custom_call.1} parent=5 // pred_region
        %s316 = ssub.s32 %s17, 1
        %p317 = pneg %p38
        %p318 = pneg %p35
        %p319 = pneg %p59
        %p320 = pneg %p56
        %p321 = scmp.lt.s32.totalorder %s22, 1
        %s322 = scalar_select %p321, %s22, 1
        %s323 = smul.addr %s322, 4
        %s324 = scalar_lea.vmem %s2, %s323
        %p325 = pneg %p85
        %p326 = pneg %p82
        %p327 = scmp.lt.s32.totalorder %s22, 1
        %s328 = scalar_select %p327, %s22, 1
        %s329 = smul.addr %s328, 8
        %s330 = scalar_lea.vmem %s3, %s329
        %p331 = pneg %p111
        %p332 = pneg %p108
        %p333 = scmp.lt.s32.totalorder %s22, 1
        %s334 = scalar_select %p333, %s22, 1
        %s335 = smul.addr %s334, 6
        %s336 = smul.addr %s335, 4
        %s337 = scalar_lea.vmem %s4, %s336
        %p338 = pneg %p137
        %p339 = pneg %p134
        %p340 = scmp.lt.s32.totalorder %s22, 1
        %s341 = scalar_select %p340, %s22, 1
        %s342 = smul.addr %s341, 6
        %s343 = smul.addr %s342, 8
        %s344 = scalar_lea.vmem %s5, %s343
        %p345 = pneg %p163
        %p346 = pneg %p160
        %p347 = scmp.lt.s32.totalorder %s22, 1
        %s348 = scalar_select %p347, %s22, 1
        %s349 = smul.addr %s348, 4
        %s350 = scalar_lea.vmem %s6, %s349
        %p351 = pneg %p189
        %p352 = pneg %p186
        %p353 = scmp.lt.s32.totalorder %s22, 1
        %s354 = scalar_select %p353, %s22, 1
        %s355 = smul.addr %s354, 8
        %s356 = scalar_lea.vmem %s7, %s355
        %p357 = pneg %p215
        %p358 = pneg %p212
        %p359 = pneg %p241
        %p360 = pneg %p238
        %s361 = sand.u32 %s228, 1
        %s362 = scalar_lea.sflag [#allocation5], %s361
        %s363 = sand.u32 %s228, 1
        %s364 = smul.addr %s363, 32
        %s365 = scalar_lea.vmem [#allocation4], %s364
        %p366 = scmp.lt.s32.totalorder %s22, 1
        %s367 = scalar_select %p366, %s22, 1
        %s368 = smul.addr %s367, 4
        %s369 = scalar_lea.vmem %s2, %s368
        %p370 = scmp.lt.s32.totalorder %s22, 1
        %s371 = scalar_select %p370, %s22, 1
        %s372 = smul.addr %s371, 8
        %s373 = scalar_lea.vmem %s3, %s372
        %p374 = scmp.lt.s32.totalorder %s22, 1
        %s375 = scalar_select %p374, %s22, 1
        %s376 = smul.addr %s375, 6
        %s377 = smul.addr %s376, 4
        %s378 = scalar_lea.vmem %s4, %s377
        %p379 = scmp.lt.s32.totalorder %s22, 1
        %s380 = scalar_select %p379, %s22, 1
        %s381 = smul.addr %s380, 6
        %s382 = smul.addr %s381, 8
        %s383 = scalar_lea.vmem %s5, %s382
        %p384 = scmp.lt.s32.totalorder %s22, 1
        %s385 = scalar_select %p384, %s22, 1
        %s386 = smul.addr %s385, 4
        %s387 = scalar_lea.vmem %s6, %s386
        %p388 = scmp.lt.s32.totalorder %s22, 1
        %s389 = scalar_select %p388, %s22, 1
        %s390 = smul.addr %s389, 8
        %s391 = scalar_lea.vmem %s7, %s390
        %v393 = vld [vmem:[%s1] sm:$0xff]
        %v394 = vld [vmem:[%s1 + $0x8] sm:$0xff]
        %v395 = vld [vmem:[%s1 + $0x10] sm:$0xff]
        %v396 = vld [vmem:[%s1 + $0x18] sm:$0xff]
        %vm397 = vcmp.gt.f32.partialorder %v393, 0.5
        %vm398 = vcmp.gt.f32.partialorder %v394, 0.5
        %vm399 = vcmp.gt.f32.partialorder %v395, 0.5
        %vm400 = vcmp.gt.f32.partialorder %v396, 0.5
        %v401 = vsel %vm397, 1, 0
        %v402 = vsel %vm398, 1, 0
        %v403 = vsel %vm399, 1, 0
        %v404 = vsel %vm400, 1, 0
        %v405 = vrot.slane %v401, 2
        %v406 = vrot.slane %v402, 2
        %v407 = vrot.slane %v403, 2
        %v408 = vrot.slane %v404, 2
        %vm409 = vcmp.ne.s32.totalorder %v405, 0
        %vm410 = vcmp.ne.s32.totalorder %v406, 0
        %vm411 = vcmp.ne.s32.totalorder %v407, 0
        %vm412 = vcmp.ne.s32.totalorder %v408, 0
        %vm413 = vmand %vm397, %vm409
        %vm414 = vmand %vm398, %vm410
        %vm415 = vmand %vm399, %vm411
        %vm416 = vmand %vm400, %vm412
        %v417 = vrot.slane %v401, 3
        %v418 = vrot.slane %v402, 3
        %v419 = vrot.slane %v403, 3
        %v420 = vrot.slane %v404, 3
        %vm421 = vcmp.ne.s32.totalorder %v417, 0
        %vm422 = vcmp.ne.s32.totalorder %v418, 0
        %vm423 = vcmp.ne.s32.totalorder %v419, 0
        %vm424 = vcmp.ne.s32.totalorder %v420, 0
        %vm425 = vmand %vm397, %vm421
        %vm426 = vmand %vm398, %vm422
        %vm427 = vmand %vm399, %vm423
        %vm428 = vmand %vm400, %vm424
        %v429 = vrot.slane %v401, 1
        %v430 = vrot.slane %v402, 1
        %v431 = vrot.slane %v403, 1
        %v432 = vrot.slane %v404, 1
        %vm433 = vcmp.ne.s32.totalorder %v429, 0
        %vm434 = vcmp.ne.s32.totalorder %v430, 0
        %vm435 = vcmp.ne.s32.totalorder %v431, 0
        %vm436 = vcmp.ne.s32.totalorder %v432, 0
        %vm437 = vmand %vm397, %vm433
        %vm438 = vmand %vm398, %vm434
        %vm439 = vmand %vm399, %vm435
        %vm440 = vmand %vm400, %vm436
        %v441 = vld [vmem:[%s0] sm:$0xff]
        %v442 = vld [vmem:[%s0 + $0x8] sm:$0xff]
        %v443 = vld [vmem:[%s0 + $0x10] sm:$0xff]
        %v444 = vld [vmem:[%s0 + $0x18] sm:$0xff]
        %445 = vrot.lane.b32.xlu0 %v441, 17
        %v446 = vpop.permute.xlu0 %445
        %447 = vrot.lane.b32.xlu0 %v442, 17
        %v448 = vpop.permute.xlu0 %447
        %449 = vrot.lane.b32.xlu0 %v443, 17
        %v450 = vpop.permute.xlu0 %449
        %451 = vrot.lane.b32.xlu0 %v444, 17
        %v452 = vpop.permute.xlu0 %451
        %v453 = vlaneseq
        %v454 = vand.u32 %v453, 127
        %vm455 = vcmp.lt.s32.totalorder %v454, 17
        %v456 = vsel %vm455, %v450, %v452
        %v457 = vsel %vm455, %v448, %v450
        %v458 = vsel %vm455, %v446, %v448
        %v459 = vsel %vm455, %v452, %v446
        %v460 = vsel %vm413, 1, 0
        %v461 = vsel %vm414, 1, 0
        %v462 = vsel %vm415, 1, 0
        %v463 = vsel %vm416, 1, 0
        %v464 = vlaneseq
        %v465 = vshrl.u32 %v464, 7
        %v466 = vsub.s32 0, %v465
        %v467 = vrot.slane %v460, %v466
        %v468 = vlaneseq
        %v469 = vshrl.u32 %v468, 7
        %v470 = vsub.s32 0, %v469
        %v471 = vrot.slane %v461, %v470
        %v472 = vlaneseq
        %v473 = vshrl.u32 %v472, 7
        %v474 = vsub.s32 0, %v473
        %v475 = vrot.slane %v462, %v474
        %v476 = vlaneseq
        %v477 = vshrl.u32 %v476, 7
        %v478 = vsub.s32 0, %v477
        %v479 = vrot.slane %v463, %v478
        %vm480 = vcmp.eq.s32.totalorder %v467, 1
        %vm481 = vcmp.eq.s32.totalorder %v471, 1
        %vm482 = vcmp.eq.s32.totalorder %v475, 1
        %vm483 = vcmp.eq.s32.totalorder %v479, 1
        %v484 = vsel %vm480, %v459, 0.0
        %v485 = vsel %vm481, %v458, 0.0
        %v486 = vsel %vm482, %v457, 0.0
        %v487 = vsel %vm483, %v456, 0.0
        %488 = vst [vmem:[#allocation2] sm:$0xff] %v484
        %489 = vst [vmem:[#allocation2 + $0x8] sm:$0xff] %v485
        %490 = vst [vmem:[#allocation2 + $0x10] sm:$0xff] %v486
        %491 = vst [vmem:[#allocation2 + $0x18] sm:$0xff] %v487
        %492 = vrot.lane.b32.xlu0 %v441, 16
        %v493 = vpop.permute.xlu0 %492
        %494 = vrot.lane.b32.xlu0 %v442, 16
        %v495 = vpop.permute.xlu0 %494
        %496 = vrot.lane.b32.xlu0 %v443, 16
        %v497 = vpop.permute.xlu0 %496
        %498 = vrot.lane.b32.xlu0 %v444, 16
        %v499 = vpop.permute.xlu0 %498
        %vm500 = vcmp.lt.s32.totalorder %v454, 16
        %v501 = vsel %vm500, %v497, %v499
        %v502 = vsel %vm500, %v495, %v497
        %v503 = vsel %vm500, %v493, %v495
        %v504 = vsel %vm500, %v499, %v493
        %vm505 = vcmp.eq.s32.totalorder %v401, 1
        %vm506 = vcmp.eq.s32.totalorder %v402, 1
        %vm507 = vcmp.eq.s32.totalorder %v403, 1
        %vm508 = vcmp.eq.s32.totalorder %v404, 1
        %v513 = vrot.slane %v504, 1
        %v514 = vrot.slane %v503, 1
        %v515 = vrot.slane %v502, 1
        %v516 = vrot.slane %v501, 1
        %v517 = vrot.slane %v504, 2
        %v518 = vrot.slane %v503, 2
        %v519 = vrot.slane %v502, 2
        %v520 = vrot.slane %v501, 2
        %v521 = vrot.slane %v504, 3
        %v522 = vrot.slane %v503, 3
        %v523 = vrot.slane %v502, 3
        %v524 = vrot.slane %v501, 3
        %v525 = vrot.slane %v504, 4
        %v526 = vrot.slane %v503, 4
        %v527 = vrot.slane %v502, 4
        %v528 = vrot.slane %v501, 4
        %v529 = vrot.slane %v504, 5
        %v530 = vrot.slane %v503, 5
        %v531 = vrot.slane %v502, 5
        %v532 = vrot.slane %v501, 5
        %v533 = vrot.slane %v504, 6
        %v534 = vrot.slane %v503, 6
        %v535 = vrot.slane %v502, 6
        %v536 = vrot.slane %v501, 6
        %v537 = vrot.slane %v504, 7
        %v538 = vrot.slane %v503, 7
        %v539 = vrot.slane %v502, 7
        %v540 = vrot.slane %v501, 7
        %v573 = vsel %vm505, %v504, 0.0
        %v574 = vsel %vm506, %v503, 0.0
        %v575 = vsel %vm507, %v502, 0.0
        %v576 = vsel %vm508, %v501, 0.0
        %v577 = vsel %vm505, %v513, 0.0
        %v578 = vsel %vm506, %v514, 0.0
        %v579 = vsel %vm507, %v515, 0.0
        %v580 = vsel %vm508, %v516, 0.0
        %v581 = vsel %vm505, %v517, 0.0
        %v582 = vsel %vm506, %v518, 0.0
        %v583 = vsel %vm507, %v519, 0.0
        %v584 = vsel %vm508, %v520, 0.0
        %v585 = vsel %vm505, %v521, 0.0
        %v586 = vsel %vm506, %v522, 0.0
        %v587 = vsel %vm507, %v523, 0.0
        %v588 = vsel %vm508, %v524, 0.0
        %v589 = vsel %vm505, %v525, 0.0
        %v590 = vsel %vm506, %v526, 0.0
        %v591 = vsel %vm507, %v527, 0.0
        %v592 = vsel %vm508, %v528, 0.0
        %v593 = vsel %vm505, %v529, 0.0
        %v594 = vsel %vm506, %v530, 0.0
        %v595 = vsel %vm507, %v531, 0.0
        %v596 = vsel %vm508, %v532, 0.0
        %v597 = vsel %vm505, %v533, 0.0
        %v598 = vsel %vm506, %v534, 0.0
        %v599 = vsel %vm507, %v535, 0.0
        %v600 = vsel %vm508, %v536, 0.0
        %v601 = vsel %vm505, %v537, 0.0
        %v602 = vsel %vm506, %v538, 0.0
        %v603 = vsel %vm507, %v539, 0.0
        %v604 = vsel %vm508, %v540, 0.0
        %v637 = vrot.slane %v577, 7
        %vm638 = vcmask 1041409
        %v639 = vsel %vm638, %v637, %v573
        %v640 = vrot.slane %v581, 6
        %vm641 = vcmask 1042434
        %v642 = vsel %vm641, %v640, %v639
        %v643 = vrot.slane %v585, 5
        %vm644 = vcmask 1043459
        %v645 = vsel %vm644, %v643, %v642
        %v646 = vrot.slane %v589, 4
        %vm647 = vcmask 1044484
        %v648 = vsel %vm647, %v646, %v645
        %v649 = vrot.slane %v593, 3
        %vm650 = vcmask 1045509
        %v651 = vsel %vm650, %v649, %v648
        %v652 = vrot.slane %v597, 2
        %vm653 = vcmask 1046534
        %v654 = vsel %vm653, %v652, %v651
        %v655 = vrot.slane %v601, 1
        %vm656 = vcmask 1047559
        %v657 = vsel %vm656, %v655, %v654
        %v658 = vrot.slane %v578, 7
        %v659 = vsel %vm638, %v658, %v574
        %v660 = vrot.slane %v582, 6
        %v661 = vsel %vm641, %v660, %v659
        %v662 = vrot.slane %v586, 5
        %v663 = vsel %vm644, %v662, %v661
        %v664 = vrot.slane %v590, 4
        %v665 = vsel %vm647, %v664, %v663
        %v666 = vrot.slane %v594, 3
        %v667 = vsel %vm650, %v666, %v665
        %v668 = vrot.slane %v598, 2
        %v669 = vsel %vm653, %v668, %v667
        %v670 = vrot.slane %v602, 1
        %v671 = vsel %vm656, %v670, %v669
        %v672 = vrot.slane %v579, 7
        %v673 = vsel %vm638, %v672, %v575
        %v674 = vrot.slane %v583, 6
        %v675 = vsel %vm641, %v674, %v673
        %v676 = vrot.slane %v587, 5
        %v677 = vsel %vm644, %v676, %v675
        %v678 = vrot.slane %v591, 4
        %v679 = vsel %vm647, %v678, %v677
        %v680 = vrot.slane %v595, 3
        %v681 = vsel %vm650, %v680, %v679
        %v682 = vrot.slane %v599, 2
        %v683 = vsel %vm653, %v682, %v681
        %v684 = vrot.slane %v603, 1
        %v685 = vsel %vm656, %v684, %v683
        %v686 = vrot.slane %v580, 7
        %v687 = vsel %vm638, %v686, %v576
        %v688 = vrot.slane %v584, 6
        %v689 = vsel %vm641, %v688, %v687
        %v690 = vrot.slane %v588, 5
        %v691 = vsel %vm644, %v690, %v689
        %v692 = vrot.slane %v592, 4
        %v693 = vsel %vm647, %v692, %v691
        %v694 = vrot.slane %v596, 3
        %v695 = vsel %vm650, %v694, %v693
        %v696 = vrot.slane %v600, 2
        %v697 = vsel %vm653, %v696, %v695
        %v698 = vrot.slane %v604, 1
        %v699 = vsel %vm656, %v698, %v697
        %704 = vst [vmem:[#allocation2 + $0x20] sm:$0xff] %v657
        %705 = vst [vmem:[#allocation2 + $0x28] sm:$0xff] %v671
        %706 = vst [vmem:[#allocation2 + $0x30] sm:$0xff] %v685
        %707 = vst [vmem:[#allocation2 + $0x38] sm:$0xff] %v699
        %708 = vrot.lane.b32.xlu0 %v441, 15
        %v709 = vpop.permute.xlu0 %708
        %710 = vrot.lane.b32.xlu0 %v442, 15
        %v711 = vpop.permute.xlu0 %710
        %712 = vrot.lane.b32.xlu0 %v443, 15
        %v713 = vpop.permute.xlu0 %712
        %714 = vrot.lane.b32.xlu0 %v444, 15
        %v715 = vpop.permute.xlu0 %714
        %vm716 = vcmp.lt.s32.totalorder %v454, 15
        %v717 = vsel %vm716, %v713, %v715
        %v718 = vsel %vm716, %v711, %v713
        %v719 = vsel %vm716, %v709, %v711
        %v720 = vsel %vm716, %v715, %v709
        %v721 = vsel %vm425, 1, 0
        %v722 = vsel %vm426, 1, 0
        %v723 = vsel %vm427, 1, 0
        %v724 = vsel %vm428, 1, 0
        %v725 = vlaneseq
        %v726 = vshrl.u32 %v725, 7
        %v727 = vsub.s32 0, %v726
        %v728 = vrot.slane %v721, %v727
        %v729 = vlaneseq
        %v730 = vshrl.u32 %v729, 7
        %v731 = vsub.s32 0, %v730
        %v732 = vrot.slane %v722, %v731
        %v733 = vlaneseq
        %v734 = vshrl.u32 %v733, 7
        %v735 = vsub.s32 0, %v734
        %v736 = vrot.slane %v723, %v735
        %v737 = vlaneseq
        %v738 = vshrl.u32 %v737, 7
        %v739 = vsub.s32 0, %v738
        %v740 = vrot.slane %v724, %v739
        %vm741 = vcmp.eq.s32.totalorder %v728, 1
        %vm742 = vcmp.eq.s32.totalorder %v732, 1
        %vm743 = vcmp.eq.s32.totalorder %v736, 1
        %vm744 = vcmp.eq.s32.totalorder %v740, 1
        %v745 = vsel %vm741, %v720, 0.0
        %v746 = vsel %vm742, %v719, 0.0
        %v747 = vsel %vm743, %v718, 0.0
        %v748 = vsel %vm744, %v717, 0.0
        %749 = vst [vmem:[#allocation2 + $0x40] sm:$0xff] %v745
        %750 = vst [vmem:[#allocation2 + $0x48] sm:$0xff] %v746
        %751 = vst [vmem:[#allocation2 + $0x50] sm:$0xff] %v747
        %752 = vst [vmem:[#allocation2 + $0x58] sm:$0xff] %v748
        %753 = vrot.lane.b32.xlu0 %v441, 1
        %v754 = vpop.permute.xlu0 %753
        %755 = vrot.lane.b32.xlu0 %v442, 1
        %v756 = vpop.permute.xlu0 %755
        %757 = vrot.lane.b32.xlu0 %v443, 1
        %v758 = vpop.permute.xlu0 %757
        %759 = vrot.lane.b32.xlu0 %v444, 1
        %v760 = vpop.permute.xlu0 %759
        %vm761 = vcmp.lt.s32.totalorder %v454, 1
        %v762 = vsel %vm761, %v758, %v760
        %v763 = vsel %vm761, %v756, %v758
        %v764 = vsel %vm761, %v754, %v756
        %v765 = vsel %vm761, %v760, %v754
        %v770 = vrot.slane %v765, 6
        %v771 = vrot.slane %v764, 6
        %v772 = vrot.slane %v763, 6
        %v773 = vrot.slane %v762, 6
        %v774 = vrot.slane %v765, 7
        %v775 = vrot.slane %v764, 7
        %v776 = vrot.slane %v763, 7
        %v777 = vrot.slane %v762, 7
        %v778 = vrot.slane %v765, 1
        %v779 = vrot.slane %v764, 1
        %v780 = vrot.slane %v763, 1
        %v781 = vrot.slane %v762, 1
        %v782 = vrot.slane %v765, 2
        %v783 = vrot.slane %v764, 2
        %v784 = vrot.slane %v763, 2
        %v785 = vrot.slane %v762, 2
        %v786 = vrot.slane %v765, 3
        %v787 = vrot.slane %v764, 3
        %v788 = vrot.slane %v763, 3
        %v789 = vrot.slane %v762, 3
        %v790 = vrot.slane %v765, 4
        %v791 = vrot.slane %v764, 4
        %v792 = vrot.slane %v763, 4
        %v793 = vrot.slane %v762, 4
        %v794 = vrot.slane %v765, 5
        %v795 = vrot.slane %v764, 5
        %v796 = vrot.slane %v763, 5
        %v797 = vrot.slane %v762, 5
        %v830 = vsel %vm505, %v770, 0.0
        %v831 = vsel %vm506, %v771, 0.0
        %v832 = vsel %vm507, %v772, 0.0
        %v833 = vsel %vm508, %v773, 0.0
        %v834 = vsel %vm505, %v774, 0.0
        %v835 = vsel %vm506, %v775, 0.0
        %v836 = vsel %vm507, %v776, 0.0
        %v837 = vsel %vm508, %v777, 0.0
        %v838 = vsel %vm505, %v765, 0.0
        %v839 = vsel %vm506, %v764, 0.0
        %v840 = vsel %vm507, %v763, 0.0
        %v841 = vsel %vm508, %v762, 0.0
        %v842 = vsel %vm505, %v778, 0.0
        %v843 = vsel %vm506, %v779, 0.0
        %v844 = vsel %vm507, %v780, 0.0
        %v845 = vsel %vm508, %v781, 0.0
        %v846 = vsel %vm505, %v782, 0.0
        %v847 = vsel %vm506, %v783, 0.0
        %v848 = vsel %vm507, %v784, 0.0
        %v849 = vsel %vm508, %v785, 0.0
        %v850 = vsel %vm505, %v786, 0.0
        %v851 = vsel %vm506, %v787, 0.0
        %v852 = vsel %vm507, %v788, 0.0
        %v853 = vsel %vm508, %v789, 0.0
        %v854 = vsel %vm505, %v790, 0.0
        %v855 = vsel %vm506, %v791, 0.0
        %v856 = vsel %vm507, %v792, 0.0
        %v857 = vsel %vm508, %v793, 0.0
        %v858 = vsel %vm505, %v794, 0.0
        %v859 = vsel %vm506, %v795, 0.0
        %v860 = vsel %vm507, %v796, 0.0
        %v861 = vsel %vm508, %v797, 0.0
        %v894 = vrot.slane %v830, 2
        %v895 = vrot.slane %v834, 1
        %v896 = vsel %vm638, %v895, %v894
        %v897 = vsel %vm641, %v838, %v896
        %v898 = vrot.slane %v842, 7
        %v899 = vsel %vm644, %v898, %v897
        %v900 = vrot.slane %v846, 6
        %v901 = vsel %vm647, %v900, %v899
        %v902 = vrot.slane %v850, 5
        %v903 = vsel %vm650, %v902, %v901
        %v904 = vrot.slane %v854, 4
        %v905 = vsel %vm653, %v904, %v903
        %v906 = vrot.slane %v858, 3
        %v907 = vsel %vm656, %v906, %v905
        %v908 = vrot.slane %v831, 2
        %v909 = vrot.slane %v835, 1
        %v910 = vsel %vm638, %v909, %v908
        %v911 = vsel %vm641, %v839, %v910
        %v912 = vrot.slane %v843, 7
        %v913 = vsel %vm644, %v912, %v911
        %v914 = vrot.slane %v847, 6
        %v915 = vsel %vm647, %v914, %v913
        %v916 = vrot.slane %v851, 5
        %v917 = vsel %vm650, %v916, %v915
        %v918 = vrot.slane %v855, 4
        %v919 = vsel %vm653, %v918, %v917
        %v920 = vrot.slane %v859, 3
        %v921 = vsel %vm656, %v920, %v919
        %v922 = vrot.slane %v832, 2
        %v923 = vrot.slane %v836, 1
        %v924 = vsel %vm638, %v923, %v922
        %v925 = vsel %vm641, %v840, %v924
        %v926 = vrot.slane %v844, 7
        %v927 = vsel %vm644, %v926, %v925
        %v928 = vrot.slane %v848, 6
        %v929 = vsel %vm647, %v928, %v927
        %v930 = vrot.slane %v852, 5
        %v931 = vsel %vm650, %v930, %v929
        %v932 = vrot.slane %v856, 4
        %v933 = vsel %vm653, %v932, %v931
        %v934 = vrot.slane %v860, 3
        %v935 = vsel %vm656, %v934, %v933
        %v936 = vrot.slane %v833, 2
        %v937 = vrot.slane %v837, 1
        %v938 = vsel %vm638, %v937, %v936
        %v939 = vsel %vm641, %v841, %v938
        %v940 = vrot.slane %v845, 7
        %v941 = vsel %vm644, %v940, %v939
        %v942 = vrot.slane %v849, 6
        %v943 = vsel %vm647, %v942, %v941
        %v944 = vrot.slane %v853, 5
        %v945 = vsel %vm650, %v944, %v943
        %v946 = vrot.slane %v857, 4
        %v947 = vsel %vm653, %v946, %v945
        %v948 = vrot.slane %v861, 3
        %v949 = vsel %vm656, %v948, %v947
        %954 = vst [vmem:[#allocation2 + $0x60] sm:$0xff] %v907
        %955 = vst [vmem:[#allocation2 + $0x68] sm:$0xff] %v921
        %956 = vst [vmem:[#allocation2 + $0x70] sm:$0xff] %v935
        %957 = vst [vmem:[#allocation2 + $0x78] sm:$0xff] %v949
        %958 = vst [vmem:[#allocation2 + $0x80] sm:$0xff] %v441
        %959 = vst [vmem:[#allocation2 + $0x88] sm:$0xff] %v442
        %960 = vst [vmem:[#allocation2 + $0x90] sm:$0xff] %v443
        %961 = vst [vmem:[#allocation2 + $0x98] sm:$0xff] %v444
        %962 = vrot.lane.b32.xlu0 %v441, 127
        %v963 = vpop.permute.xlu0 %962
        %964 = vrot.lane.b32.xlu0 %v442, 127
        %v965 = vpop.permute.xlu0 %964
        %966 = vrot.lane.b32.xlu0 %v443, 127
        %v967 = vpop.permute.xlu0 %966
        %968 = vrot.lane.b32.xlu0 %v444, 127
        %v969 = vpop.permute.xlu0 %968
        %vm970 = vcmp.lt.s32.totalorder %v454, 127
        %v971 = vsel %vm970, %v967, %v969
        %v972 = vsel %vm970, %v965, %v967
        %v973 = vsel %vm970, %v963, %v965
        %v974 = vsel %vm970, %v969, %v963
        %v979 = vrot.slane %v973, 5
        %v980 = vrot.slane %v972, 5
        %v981 = vrot.slane %v971, 5
        %v982 = vrot.slane %v974, 5
        %v983 = vrot.slane %v973, 6
        %v984 = vrot.slane %v972, 6
        %v985 = vrot.slane %v971, 6
        %v986 = vrot.slane %v974, 6
        %v987 = vrot.slane %v973, 7
        %v988 = vrot.slane %v972, 7
        %v989 = vrot.slane %v971, 7
        %v990 = vrot.slane %v974, 7
        %v991 = vrot.slane %v973, 1
        %v992 = vrot.slane %v972, 1
        %v993 = vrot.slane %v971, 1
        %v994 = vrot.slane %v974, 1
        %v995 = vrot.slane %v973, 2
        %v996 = vrot.slane %v972, 2
        %v997 = vrot.slane %v971, 2
        %v998 = vrot.slane %v974, 2
        %v999 = vrot.slane %v973, 3
        %v1000 = vrot.slane %v972, 3
        %v1001 = vrot.slane %v971, 3
        %v1002 = vrot.slane %v974, 3
        %v1003 = vrot.slane %v973, 4
        %v1004 = vrot.slane %v972, 4
        %v1005 = vrot.slane %v971, 4
        %v1006 = vrot.slane %v974, 4
        %v1039 = vsel %vm505, %v979, 0.0
        %v1040 = vsel %vm506, %v980, 0.0
        %v1041 = vsel %vm507, %v981, 0.0
        %v1042 = vsel %vm508, %v982, 0.0
        %v1043 = vsel %vm505, %v983, 0.0
        %v1044 = vsel %vm506, %v984, 0.0
        %v1045 = vsel %vm507, %v985, 0.0
        %v1046 = vsel %vm508, %v986, 0.0
        %v1047 = vsel %vm505, %v987, 0.0
        %v1048 = vsel %vm506, %v988, 0.0
        %v1049 = vsel %vm507, %v989, 0.0
        %v1050 = vsel %vm508, %v990, 0.0
        %v1051 = vsel %vm505, %v973, 0.0
        %v1052 = vsel %vm506, %v972, 0.0
        %v1053 = vsel %vm507, %v971, 0.0
        %v1054 = vsel %vm508, %v974, 0.0
        %v1055 = vsel %vm505, %v991, 0.0
        %v1056 = vsel %vm506, %v992, 0.0
        %v1057 = vsel %vm507, %v993, 0.0
        %v1058 = vsel %vm508, %v994, 0.0
        %v1059 = vsel %vm505, %v995, 0.0
        %v1060 = vsel %vm506, %v996, 0.0
        %v1061 = vsel %vm507, %v997, 0.0
        %v1062 = vsel %vm508, %v998, 0.0
        %v1063 = vsel %vm505, %v999, 0.0
        %v1064 = vsel %vm506, %v1000, 0.0
        %v1065 = vsel %vm507, %v1001, 0.0
        %v1066 = vsel %vm508, %v1002, 0.0
        %v1067 = vsel %vm505, %v1003, 0.0
        %v1068 = vsel %vm506, %v1004, 0.0
        %v1069 = vsel %vm507, %v1005, 0.0
        %v1070 = vsel %vm508, %v1006, 0.0
        %v1103 = vrot.slane %v1039, 3
        %v1104 = vrot.slane %v1043, 2
        %v1105 = vsel %vm638, %v1104, %v1103
        %v1106 = vrot.slane %v1047, 1
        %v1107 = vsel %vm641, %v1106, %v1105
        %v1108 = vsel %vm644, %v1051, %v1107
        %v1109 = vrot.slane %v1055, 7
        %v1110 = vsel %vm647, %v1109, %v1108
        %v1111 = vrot.slane %v1059, 6
        %v1112 = vsel %vm650, %v1111, %v1110
        %v1113 = vrot.slane %v1063, 5
        %v1114 = vsel %vm653, %v1113, %v1112
        %v1115 = vrot.slane %v1067, 4
        %v1116 = vsel %vm656, %v1115, %v1114
        %v1117 = vrot.slane %v1040, 3
        %v1118 = vrot.slane %v1044, 2
        %v1119 = vsel %vm638, %v1118, %v1117
        %v1120 = vrot.slane %v1048, 1
        %v1121 = vsel %vm641, %v1120, %v1119
        %v1122 = vsel %vm644, %v1052, %v1121
        %v1123 = vrot.slane %v1056, 7
        %v1124 = vsel %vm647, %v1123, %v1122
        %v1125 = vrot.slane %v1060, 6
        %v1126 = vsel %vm650, %v1125, %v1124
        %v1127 = vrot.slane %v1064, 5
        %v1128 = vsel %vm653, %v1127, %v1126
        %v1129 = vrot.slane %v1068, 4
        %v1130 = vsel %vm656, %v1129, %v1128
        %v1131 = vrot.slane %v1041, 3
        %v1132 = vrot.slane %v1045, 2
        %v1133 = vsel %vm638, %v1132, %v1131
        %v1134 = vrot.slane %v1049, 1
        %v1135 = vsel %vm641, %v1134, %v1133
        %v1136 = vsel %vm644, %v1053, %v1135
        %v1137 = vrot.slane %v1057, 7
        %v1138 = vsel %vm647, %v1137, %v1136
        %v1139 = vrot.slane %v1061, 6
        %v1140 = vsel %vm650, %v1139, %v1138
        %v1141 = vrot.slane %v1065, 5
        %v1142 = vsel %vm653, %v1141, %v1140
        %v1143 = vrot.slane %v1069, 4
        %v1144 = vsel %vm656, %v1143, %v1142
        %v1145 = vrot.slane %v1042, 3
        %v1146 = vrot.slane %v1046, 2
        %v1147 = vsel %vm638, %v1146, %v1145
        %v1148 = vrot.slane %v1050, 1
        %v1149 = vsel %vm641, %v1148, %v1147
        %v1150 = vsel %vm644, %v1054, %v1149
        %v1151 = vrot.slane %v1058, 7
        %v1152 = vsel %vm647, %v1151, %v1150
        %v1153 = vrot.slane %v1062, 6
        %v1154 = vsel %vm650, %v1153, %v1152
        %v1155 = vrot.slane %v1066, 5
        %v1156 = vsel %vm653, %v1155, %v1154
        %v1157 = vrot.slane %v1070, 4
        %v1158 = vsel %vm656, %v1157, %v1156
        %1163 = vst [vmem:[#allocation2 + $0xa0] sm:$0xff] %v1116
        %1164 = vst [vmem:[#allocation2 + $0xa8] sm:$0xff] %v1130
        %1165 = vst [vmem:[#allocation2 + $0xb0] sm:$0xff] %v1144
        %1166 = vst [vmem:[#allocation2 + $0xb8] sm:$0xff] %v1158
        %1167 = vrot.lane.b32.xlu0 %v441, 113
        %v1168 = vpop.permute.xlu0 %1167
        %1169 = vrot.lane.b32.xlu0 %v442, 113
        %v1170 = vpop.permute.xlu0 %1169
        %1171 = vrot.lane.b32.xlu0 %v443, 113
        %v1172 = vpop.permute.xlu0 %1171
        %1173 = vrot.lane.b32.xlu0 %v444, 113
        %v1174 = vpop.permute.xlu0 %1173
        %vm1175 = vcmp.lt.s32.totalorder %v454, 113
        %v1176 = vsel %vm1175, %v1172, %v1174
        %v1177 = vsel %vm1175, %v1170, %v1172
        %v1178 = vsel %vm1175, %v1168, %v1170
        %v1179 = vsel %vm1175, %v1174, %v1168
        %v1180 = vsel %vm437, 1, 0
        %v1181 = vsel %vm438, 1, 0
        %v1182 = vsel %vm439, 1, 0
        %v1183 = vsel %vm440, 1, 0
        %v1184 = vlaneseq
        %v1185 = vshrl.u32 %v1184, 7
        %v1186 = vsub.s32 1, %v1185
        %v1187 = vrot.slane %v1180, %v1186
        %v1188 = vlaneseq
        %v1189 = vshrl.u32 %v1188, 7
        %v1190 = vsub.s32 1, %v1189
        %v1191 = vrot.slane %v1181, %v1190
        %v1192 = vlaneseq
        %v1193 = vshrl.u32 %v1192, 7
        %v1194 = vsub.s32 1, %v1193
        %v1195 = vrot.slane %v1182, %v1194
        %v1196 = vlaneseq
        %v1197 = vshrl.u32 %v1196, 7
        %v1198 = vsub.s32 1, %v1197
        %v1199 = vrot.slane %v1183, %v1198
        %vm1200 = vcmp.eq.s32.totalorder %v1187, 1
        %vm1201 = vcmp.eq.s32.totalorder %v1191, 1
        %vm1202 = vcmp.eq.s32.totalorder %v1195, 1
        %vm1203 = vcmp.eq.s32.totalorder %v1199, 1
        %v1204 = vsel %vm1200, %v1178, 0.0
        %v1205 = vsel %vm1201, %v1177, 0.0
        %v1206 = vsel %vm1202, %v1176, 0.0
        %v1207 = vsel %vm1203, %v1179, 0.0
        %1208 = vst [vmem:[#allocation2 + $0xc0] sm:$0xff] %v1204
        %1209 = vst [vmem:[#allocation2 + $0xc8] sm:$0xff] %v1205
        %1210 = vst [vmem:[#allocation2 + $0xd0] sm:$0xff] %v1206
        %1211 = vst [vmem:[#allocation2 + $0xd8] sm:$0xff] %v1207
        %1212 = vrot.lane.b32.xlu0 %v441, 112
        %v1213 = vpop.permute.xlu0 %1212
        %1214 = vrot.lane.b32.xlu0 %v442, 112
        %v1215 = vpop.permute.xlu0 %1214
        %1216 = vrot.lane.b32.xlu0 %v443, 112
        %v1217 = vpop.permute.xlu0 %1216
        %1218 = vrot.lane.b32.xlu0 %v444, 112
        %v1219 = vpop.permute.xlu0 %1218
        %vm1220 = vcmp.lt.s32.totalorder %v454, 112
        %v1221 = vsel %vm1220, %v1217, %v1219
        %v1222 = vsel %vm1220, %v1215, %v1217
        %v1223 = vsel %vm1220, %v1213, %v1215
        %v1224 = vsel %vm1220, %v1219, %v1213
        %v1229 = vrot.slane %v1223, 7
        %v1230 = vrot.slane %v1222, 7
        %v1231 = vrot.slane %v1221, 7
        %v1232 = vrot.slane %v1224, 7
        %v1233 = vrot.slane %v1223, 1
        %v1234 = vrot.slane %v1222, 1
        %v1235 = vrot.slane %v1221, 1
        %v1236 = vrot.slane %v1224, 1
        %v1237 = vrot.slane %v1223, 2
        %v1238 = vrot.slane %v1222, 2
        %v1239 = vrot.slane %v1221, 2
        %v1240 = vrot.slane %v1224, 2
        %v1241 = vrot.slane %v1223, 3
        %v1242 = vrot.slane %v1222, 3
        %v1243 = vrot.slane %v1221, 3
        %v1244 = vrot.slane %v1224, 3
        %v1245 = vrot.slane %v1223, 4
        %v1246 = vrot.slane %v1222, 4
        %v1247 = vrot.slane %v1221, 4
        %v1248 = vrot.slane %v1224, 4
        %v1249 = vrot.slane %v1223, 5
        %v1250 = vrot.slane %v1222, 5
        %v1251 = vrot.slane %v1221, 5
        %v1252 = vrot.slane %v1224, 5
        %v1253 = vrot.slane %v1223, 6
        %v1254 = vrot.slane %v1222, 6
        %v1255 = vrot.slane %v1221, 6
        %v1256 = vrot.slane %v1224, 6
        %v1289 = vsel %vm505, %v1229, 0.0
        %v1290 = vsel %vm506, %v1230, 0.0
        %v1291 = vsel %vm507, %v1231, 0.0
        %v1292 = vsel %vm508, %v1232, 0.0
        %v1293 = vsel %vm505, %v1223, 0.0
        %v1294 = vsel %vm506, %v1222, 0.0
        %v1295 = vsel %vm507, %v1221, 0.0
        %v1296 = vsel %vm508, %v1224, 0.0
        %v1297 = vsel %vm505, %v1233, 0.0
        %v1298 = vsel %vm506, %v1234, 0.0
        %v1299 = vsel %vm507, %v1235, 0.0
        %v1300 = vsel %vm508, %v1236, 0.0
        %v1301 = vsel %vm505, %v1237, 0.0
        %v1302 = vsel %vm506, %v1238, 0.0
        %v1303 = vsel %vm507, %v1239, 0.0
        %v1304 = vsel %vm508, %v1240, 0.0
        %v1305 = vsel %vm505, %v1241, 0.0
        %v1306 = vsel %vm506, %v1242, 0.0
        %v1307 = vsel %vm507, %v1243, 0.0
        %v1308 = vsel %vm508, %v1244, 0.0
        %v1309 = vsel %vm505, %v1245, 0.0
        %v1310 = vsel %vm506, %v1246, 0.0
        %v1311 = vsel %vm507, %v1247, 0.0
        %v1312 = vsel %vm508, %v1248, 0.0
        %v1313 = vsel %vm505, %v1249, 0.0
        %v1314 = vsel %vm506, %v1250, 0.0
        %v1315 = vsel %vm507, %v1251, 0.0
        %v1316 = vsel %vm508, %v1252, 0.0
        %v1317 = vsel %vm505, %v1253, 0.0
        %v1318 = vsel %vm506, %v1254, 0.0
        %v1319 = vsel %vm507, %v1255, 0.0
        %v1320 = vsel %vm508, %v1256, 0.0
        %v1353 = vrot.slane %v1289, 1
        %v1354 = vsel %vm638, %v1293, %v1353
        %v1355 = vrot.slane %v1297, 7
        %v1356 = vsel %vm641, %v1355, %v1354
        %v1357 = vrot.slane %v1301, 6
        %v1358 = vsel %vm644, %v1357, %v1356
        %v1359 = vrot.slane %v1305, 5
        %v1360 = vsel %vm647, %v1359, %v1358
        %v1361 = vrot.slane %v1309, 4
        %v1362 = vsel %vm650, %v1361, %v1360
        %v1363 = vrot.slane %v1313, 3
        %v1364 = vsel %vm653, %v1363, %v1362
        %v1365 = vrot.slane %v1317, 2
        %v1366 = vsel %vm656, %v1365, %v1364
        %v1367 = vrot.slane %v1290, 1
        %v1368 = vsel %vm638, %v1294, %v1367
        %v1369 = vrot.slane %v1298, 7
        %v1370 = vsel %vm641, %v1369, %v1368
        %v1371 = vrot.slane %v1302, 6
        %v1372 = vsel %vm644, %v1371, %v1370
        %v1373 = vrot.slane %v1306, 5
        %v1374 = vsel %vm647, %v1373, %v1372
        %v1375 = vrot.slane %v1310, 4
        %v1376 = vsel %vm650, %v1375, %v1374
        %v1377 = vrot.slane %v1314, 3
        %v1378 = vsel %vm653, %v1377, %v1376
        %v1379 = vrot.slane %v1318, 2
        %v1380 = vsel %vm656, %v1379, %v1378
        %v1381 = vrot.slane %v1291, 1
        %v1382 = vsel %vm638, %v1295, %v1381
        %v1383 = vrot.slane %v1299, 7
        %v1384 = vsel %vm641, %v1383, %v1382
        %v1385 = vrot.slane %v1303, 6
        %v1386 = vsel %vm644, %v1385, %v1384
        %v1387 = vrot.slane %v1307, 5
        %v1388 = vsel %vm647, %v1387, %v1386
        %v1389 = vrot.slane %v1311, 4
        %v1390 = vsel %vm650, %v1389, %v1388
        %v1391 = vrot.slane %v1315, 3
        %v1392 = vsel %vm653, %v1391, %v1390
        %v1393 = vrot.slane %v1319, 2
        %v1394 = vsel %vm656, %v1393, %v1392
        %v1395 = vrot.slane %v1292, 1
        %v1396 = vsel %vm638, %v1296, %v1395
        %v1397 = vrot.slane %v1300, 7
        %v1398 = vsel %vm641, %v1397, %v1396
        %v1399 = vrot.slane %v1304, 6
        %v1400 = vsel %vm644, %v1399, %v1398
        %v1401 = vrot.slane %v1308, 5
        %v1402 = vsel %vm647, %v1401, %v1400
        %v1403 = vrot.slane %v1312, 4
        %v1404 = vsel %vm650, %v1403, %v1402
        %v1405 = vrot.slane %v1316, 3
        %v1406 = vsel %vm653, %v1405, %v1404
        %v1407 = vrot.slane %v1320, 2
        %v1408 = vsel %vm656, %v1407, %v1406
        %1413 = vst [vmem:[#allocation2 + $0xe0] sm:$0xff] %v1366
        %1414 = vst [vmem:[#allocation2 + $0xe8] sm:$0xff] %v1380
        %1415 = vst [vmem:[#allocation2 + $0xf0] sm:$0xff] %v1394
        %1416 = vst [vmem:[#allocation2 + $0xf8] sm:$0xff] %v1408
        %1417 = vrot.lane.b32.xlu0 %v441, 111
        %v1418 = vpop.permute.xlu0 %1417
        %1419 = vrot.lane.b32.xlu0 %v442, 111
        %v1420 = vpop.permute.xlu0 %1419
        %1421 = vrot.lane.b32.xlu0 %v443, 111
        %v1422 = vpop.permute.xlu0 %1421
        %1423 = vrot.lane.b32.xlu0 %v444, 111
        %v1424 = vpop.permute.xlu0 %1423
        %vm1425 = vcmp.lt.s32.totalorder %v454, 111
        %v1426 = vsel %vm1425, %v1422, %v1424
        %v1427 = vsel %vm1425, %v1420, %v1422
        %v1428 = vsel %vm1425, %v1418, %v1420
        %v1429 = vsel %vm1425, %v1424, %v1418
        %v1430 = vlaneseq
        %v1431 = vshrl.u32 %v1430, 7
        %v1432 = vsub.s32 1, %v1431
        %v1433 = vrot.slane %v460, %v1432
        %v1434 = vlaneseq
        %v1435 = vshrl.u32 %v1434, 7
        %v1436 = vsub.s32 1, %v1435
        %v1437 = vrot.slane %v461, %v1436
        %v1438 = vlaneseq
        %v1439 = vshrl.u32 %v1438, 7
        %v1440 = vsub.s32 1, %v1439
        %v1441 = vrot.slane %v462, %v1440
        %v1442 = vlaneseq
        %v1443 = vshrl.u32 %v1442, 7
        %v1444 = vsub.s32 1, %v1443
        %v1445 = vrot.slane %v463, %v1444
        %vm1446 = vcmp.eq.s32.totalorder %v1433, 1
        %vm1447 = vcmp.eq.s32.totalorder %v1437, 1
        %vm1448 = vcmp.eq.s32.totalorder %v1441, 1
        %vm1449 = vcmp.eq.s32.totalorder %v1445, 1
        %v1450 = vsel %vm1446, %v1428, 0.0
        %v1451 = vsel %vm1447, %v1427, 0.0
        %v1452 = vsel %vm1448, %v1426, 0.0
        %v1453 = vsel %vm1449, %v1429, 0.0
        %1454 = vst [vmem:[#allocation2 + $0x100] sm:$0xff] %v1450
        %1455 = vst [vmem:[#allocation2 + $0x108] sm:$0xff] %v1451
        %1456 = vst [vmem:[#allocation2 + $0x110] sm:$0xff] %v1452
        %1457 = vst [vmem:[#allocation2 + $0x118] sm:$0xff] %v1453
        %v1458 = vld [vmem:[%s369] sm:$0xf]
        %v1459 = vld [vmem:[#allocation2] sm:$0xff]
        %v1460 = vld [vmem:[#allocation2 + $0x8] sm:$0xff]
        %v1461 = vld [vmem:[#allocation2 + $0x10] sm:$0xff]
        %v1462 = vld [vmem:[#allocation2 + $0x18] sm:$0xff]
        %v1463 = vld [vmem:[#allocation2 + $0x20] sm:$0xff]
        %v1464 = vld [vmem:[#allocation2 + $0x28] sm:$0xff]
        %v1465 = vld [vmem:[#allocation2 + $0x30] sm:$0xff]
        %v1466 = vld [vmem:[#allocation2 + $0x38] sm:$0xff]
        %v1467 = vld [vmem:[#allocation2 + $0x40] sm:$0xff]
        %v1468 = vld [vmem:[#allocation2 + $0x48] sm:$0xff]
        %v1469 = vld [vmem:[#allocation2 + $0x50] sm:$0xff]
        %v1470 = vld [vmem:[#allocation2 + $0x58] sm:$0xff]
        %v1471 = vld [vmem:[#allocation2 + $0x60] sm:$0xff]
        %v1472 = vld [vmem:[#allocation2 + $0x68] sm:$0xff]
        %v1473 = vld [vmem:[#allocation2 + $0x70] sm:$0xff]
        %v1474 = vld [vmem:[#allocation2 + $0x78] sm:$0xff]
        %v1475 = vld [vmem:[#allocation2 + $0x80] sm:$0xff]
        %v1476 = vld [vmem:[#allocation2 + $0x88] sm:$0xff]
        %v1477 = vld [vmem:[#allocation2 + $0x90] sm:$0xff]
        %v1478 = vld [vmem:[#allocation2 + $0x98] sm:$0xff]
        %v1479 = vld [vmem:[#allocation2 + $0xa0] sm:$0xff]
        %v1480 = vld [vmem:[#allocation2 + $0xa8] sm:$0xff]
        %v1481 = vld [vmem:[#allocation2 + $0xb0] sm:$0xff]
        %v1482 = vld [vmem:[#allocation2 + $0xb8] sm:$0xff]
        %v1483 = vld [vmem:[#allocation2 + $0xc0] sm:$0xff]
        %v1484 = vld [vmem:[#allocation2 + $0xc8] sm:$0xff]
        %v1485 = vld [vmem:[#allocation2 + $0xd0] sm:$0xff]
        %v1486 = vld [vmem:[#allocation2 + $0xd8] sm:$0xff]
        %v1487 = vld [vmem:[#allocation2 + $0xe0] sm:$0xff]
        %v1488 = vld [vmem:[#allocation2 + $0xe8] sm:$0xff]
        %v1489 = vld [vmem:[#allocation2 + $0xf0] sm:$0xff]
        %v1490 = vld [vmem:[#allocation2 + $0xf8] sm:$0xff]
        %v1491 = vld [vmem:[#allocation2 + $0x100] sm:$0xff]
        %v1492 = vld [vmem:[#allocation2 + $0x108] sm:$0xff]
        %v1493 = vld [vmem:[#allocation2 + $0x110] sm:$0xff]
        %v1494 = vld [vmem:[#allocation2 + $0x118] sm:$0xff]
        %v1495 = vpack.c.bf16 %v1463, %v1459
        %v1496 = vpack.c.bf16 %v1464, %v1460
        %v1497 = vpack.c.bf16 %v1465, %v1461
        %v1498 = vpack.c.bf16 %v1466, %v1462
        %v1499 = vpack.c.bf16 %v1471, %v1467
        %v1500 = vpack.c.bf16 %v1472, %v1468
        %v1501 = vpack.c.bf16 %v1473, %v1469
        %v1502 = vpack.c.bf16 %v1474, %v1470
        %v1503 = vpack.c.bf16 %v1479, %v1475
        %v1504 = vpack.c.bf16 %v1480, %v1476
        %v1505 = vpack.c.bf16 %v1481, %v1477
        %v1506 = vpack.c.bf16 %v1482, %v1478
        %v1507 = vpack.c.bf16 %v1487, %v1483
        %v1508 = vpack.c.bf16 %v1488, %v1484
        %v1509 = vpack.c.bf16 %v1489, %v1485
        %v1510 = vpack.c.bf16 %v1490, %v1486
        %v1511 = vpack.c.bf16 %v1491, %v1491
        %v1512 = vpack.c.bf16 %v1492, %v1492
        %v1513 = vpack.c.bf16 %v1493, %v1493
        %v1514 = vpack.c.bf16 %v1494, %v1494
        %v1515 = vld [vmem:[%s373] sm:$0xff]
        %1517 = vset.pattern.permute.xlu0 0
        %1518 = vperm.xlu0 %1517, %v1515
        %v1519 = vpop.permute.xlu0 %1518
        %vm1521 = vcmask 588800
        %v1523 = vsel %vm1521, %v1458, 0
        %vm1525 = vcmask 1043456
        %v1527 = vsel %vm1525, %v1511, 0
        %v1530 = vsel %vm1525, %v1512, 0
        %v1533 = vsel %vm1525, %v1513, 0
        %v1536 = vsel %vm1525, %v1514, 0
        %1538 = vmatprep.subr.bf16.mxu0 %v1496
        %1539 = vmatpush1.bf16.msra.mxu0 %v1495
        %1540 = vmatprep.subr.bf16.mxu0 %v1500
        %1541 = vmatpush1.bf16.msra.mxu0 %v1499
        %1542 = vmatprep.subr.bf16.mxu0 %v1504
        %1543 = vmatpush1.bf16.msra.mxu0 %v1503
        %1544 = vmatprep.subr.bf16.mxu0 %v1508
        %1545 = vmatpush1.bf16.msra.mxu0 %v1507
        %1546 = vmatprep.subr.bf16.mxu0 %v1530
        %1547 = vmatpush1.bf16.msra.mxu0 %v1527
        %1548 = vmatprep.subr.bf16.mxu0 0
        %1549 = vmatpush1.bf16.msra.mxu0 0
        %1550 = vmatprep.subr.bf16.mxu0 0
        %1551 = vmatpush1.bf16.msra.mxu0 0
        %1552 = vmatprep.subr.bf16.mxu0 0
        %1553 = vmatpush1.bf16.msra.mxu0 0
        %1554 = vmatprep.subr.bf16.mxu0 0
        %1555 = vmatpush1.bf16.msra.mxu0 0
        %1556 = vmatprep.subr.bf16.mxu0 0
        %1557 = vmatpush1.bf16.msra.mxu0 0
        %1558 = vmatprep.subr.bf16.mxu0 0
        %1559 = vmatpush1.bf16.msra.mxu0 0
        %1560 = vmatprep.subr.bf16.mxu0 0
        %1561 = vmatpush1.bf16.msra.mxu0 0
        %1562 = vmatprep.subr.bf16.mxu0 0
        %1563 = vmatpush1.bf16.msra.mxu0 0
        %1564 = vmatprep.subr.bf16.mxu0 0
        %1565 = vmatpush1.bf16.msra.mxu0 0
        %1566 = vmatprep.subr.bf16.mxu0 0
        %1567 = vmatpush1.bf16.msra.mxu0 0
        %1568 = vmatprep.subr.bf16.mxu0 0
        %1569 = vmatpush1.bf16.msra.mxu0 0
        %1570 = vmatprep.mubr.bf16.mxu0 0
        %1571 = vmatmul.mubr.bf16.gmra.mrb[0].mxu0 %v1523
        %v1572 = vpop.f32.mrb[0].mxu0
        %v1573 = vadd.f32 %v1519, %v1572
        %v1574 = vpop.f32.mrb[0].mxu0
        %v1575 = vadd.f32 %v1519, %v1574
        %v1576 = vpop.f32.mrb[0].mxu0
        %v1577 = vpop.f32.mrb[0].mxu0
        %1578 = vdwg.mxu0
        %1579 = vmatprep.subr.bf16.mxu0 %v1498
        %1580 = vmatpush1.bf16.msra.mxu0 %v1497
        %1581 = vmatprep.subr.bf16.mxu0 %v1502
        %1582 = vmatpush1.bf16.msra.mxu0 %v1501
        %1583 = vmatprep.subr.bf16.mxu0 %v1506
        %1584 = vmatpush1.bf16.msra.mxu0 %v1505
        %1585 = vmatprep.subr.bf16.mxu0 %v1510
        %1586 = vmatpush1.bf16.msra.mxu0 %v1509
        %1587 = vmatprep.subr.bf16.mxu0 %v1536
        %1588 = vmatpush1.bf16.msra.mxu0 %v1533
        %1589 = vmatprep.subr.bf16.mxu0 0
        %1590 = vmatpush1.bf16.msra.mxu0 0
        %1591 = vmatprep.subr.bf16.mxu0 0
        %1592 = vmatpush1.bf16.msra.mxu0 0
        %1593 = vmatprep.subr.bf16.mxu0 0
        %1594 = vmatpush1.bf16.msra.mxu0 0
        %1595 = vmatprep.subr.bf16.mxu0 0
        %1596 = vmatpush1.bf16.msra.mxu0 0
        %1597 = vmatprep.subr.bf16.mxu0 0
        %1598 = vmatpush1.bf16.msra.mxu0 0
        %1599 = vmatprep.subr.bf16.mxu0 0
        %1600 = vmatpush1.bf16.msra.mxu0 0
        %1601 = vmatprep.subr.bf16.mxu0 0
        %1602 = vmatpush1.bf16.msra.mxu0 0
        %1603 = vmatprep.subr.bf16.mxu0 0
        %1604 = vmatpush1.bf16.msra.mxu0 0
        %1605 = vmatprep.subr.bf16.mxu0 0
        %1606 = vmatpush1.bf16.msra.mxu0 0
        %1607 = vmatprep.subr.bf16.mxu0 0
        %1608 = vmatpush1.bf16.msra.mxu0 0
        %1609 = vmatprep.subr.bf16.mxu0 0
        %1610 = vmatpush1.bf16.msra.mxu0 0
        %1611 = vmatprep.mubr.bf16.mxu0 0
        %1612 = vmatmul.mubr.bf16.gmra.mrb[0].mxu0 %v1523
        %v1613 = vpop.f32.mrb[0].mxu0
        %v1614 = vadd.f32 %v1519, %v1613
        %v1615 = vpop.f32.mrb[0].mxu0
        %v1616 = vadd.f32 %v1519, %v1615
        %v1617 = vpop.f32.mrb[0].mxu0
        %v1618 = vpop.f32.mrb[0].mxu0
        %1619 = vdwg.mxu0
        %v1620 = vmax.f32 %v1573, 0.0
        %v1621 = vmax.f32 %v1575, 0.0
        %v1622 = vmax.f32 %v1614, 0.0
        %v1623 = vmax.f32 %v1616, 0.0
        %1624 = vrot.lane.b32.xlu0 %v1620, 17
        %v1625 = vpop.permute.xlu0 %1624
        %1626 = vrot.lane.b32.xlu0 %v1621, 17
        %v1627 = vpop.permute.xlu0 %1626
        %1628 = vrot.lane.b32.xlu0 %v1622, 17
        %v1629 = vpop.permute.xlu0 %1628
        %1630 = vrot.lane.b32.xlu0 %v1623, 17
        %v1631 = vpop.permute.xlu0 %1630
        %v1632 = vsel %vm455, %v1629, %v1631
        %v1633 = vsel %vm455, %v1627, %v1629
        %v1634 = vsel %vm455, %v1625, %v1627
        %v1635 = vsel %vm455, %v1631, %v1625
        %v1636 = vsel %vm480, %v1635, 0.0
        %v1637 = vsel %vm481, %v1634, 0.0
        %v1638 = vsel %vm482, %v1633, 0.0
        %v1639 = vsel %vm483, %v1632, 0.0
        %1640 = vst [vmem:[#allocation3] sm:$0xff] %v1636
        %1641 = vst [vmem:[#allocation3 + $0x8] sm:$0xff] %v1637
        %1642 = vst [vmem:[#allocation3 + $0x10] sm:$0xff] %v1638
        %1643 = vst [vmem:[#allocation3 + $0x18] sm:$0xff] %v1639
        %1644 = vrot.lane.b32.xlu0 %v1620, 16
        %v1645 = vpop.permute.xlu0 %1644
        %1646 = vrot.lane.b32.xlu0 %v1621, 16
        %v1647 = vpop.permute.xlu0 %1646
        %1648 = vrot.lane.b32.xlu0 %v1622, 16
        %v1649 = vpop.permute.xlu0 %1648
        %1650 = vrot.lane.b32.xlu0 %v1623, 16
        %v1651 = vpop.permute.xlu0 %1650
        %v1652 = vsel %vm500, %v1649, %v1651
        %v1653 = vsel %vm500, %v1647, %v1649
        %v1654 = vsel %vm500, %v1645, %v1647
        %v1655 = vsel %vm500, %v1651, %v1645
        %v1660 = vrot.slane %v1655, 1
        %v1661 = vrot.slane %v1654, 1
        %v1662 = vrot.slane %v1653, 1
        %v1663 = vrot.slane %v1652, 1
        %v1664 = vrot.slane %v1655, 2
        %v1665 = vrot.slane %v1654, 2
        %v1666 = vrot.slane %v1653, 2
        %v1667 = vrot.slane %v1652, 2
        %v1668 = vrot.slane %v1655, 3
        %v1669 = vrot.slane %v1654, 3
        %v1670 = vrot.slane %v1653, 3
        %v1671 = vrot.slane %v1652, 3
        %v1672 = vrot.slane %v1655, 4
        %v1673 = vrot.slane %v1654, 4
        %v1674 = vrot.slane %v1653, 4
        %v1675 = vrot.slane %v1652, 4
        %v1676 = vrot.slane %v1655, 5
        %v1677 = vrot.slane %v1654, 5
        %v1678 = vrot.slane %v1653, 5
        %v1679 = vrot.slane %v1652, 5
        %v1680 = vrot.slane %v1655, 6
        %v1681 = vrot.slane %v1654, 6
        %v1682 = vrot.slane %v1653, 6
        %v1683 = vrot.slane %v1652, 6
        %v1684 = vrot.slane %v1655, 7
        %v1685 = vrot.slane %v1654, 7
        %v1686 = vrot.slane %v1653, 7
        %v1687 = vrot.slane %v1652, 7
        %v1720 = vsel %vm505, %v1655, 0.0
        %v1721 = vsel %vm506, %v1654, 0.0
        %v1722 = vsel %vm507, %v1653, 0.0
        %v1723 = vsel %vm508, %v1652, 0.0
        %v1724 = vsel %vm505, %v1660, 0.0
        %v1725 = vsel %vm506, %v1661, 0.0
        %v1726 = vsel %vm507, %v1662, 0.0
        %v1727 = vsel %vm508, %v1663, 0.0
        %v1728 = vsel %vm505, %v1664, 0.0
        %v1729 = vsel %vm506, %v1665, 0.0
        %v1730 = vsel %vm507, %v1666, 0.0
        %v1731 = vsel %vm508, %v1667, 0.0
        %v1732 = vsel %vm505, %v1668, 0.0
        %v1733 = vsel %vm506, %v1669, 0.0
        %v1734 = vsel %vm507, %v1670, 0.0
        %v1735 = vsel %vm508, %v1671, 0.0
        %v1736 = vsel %vm505, %v1672, 0.0
        %v1737 = vsel %vm506, %v1673, 0.0
        %v1738 = vsel %vm507, %v1674, 0.0
        %v1739 = vsel %vm508, %v1675, 0.0
        %v1740 = vsel %vm505, %v1676, 0.0
        %v1741 = vsel %vm506, %v1677, 0.0
        %v1742 = vsel %vm507, %v1678, 0.0
        %v1743 = vsel %vm508, %v1679, 0.0
        %v1744 = vsel %vm505, %v1680, 0.0
        %v1745 = vsel %vm506, %v1681, 0.0
        %v1746 = vsel %vm507, %v1682, 0.0
        %v1747 = vsel %vm508, %v1683, 0.0
        %v1748 = vsel %vm505, %v1684, 0.0
        %v1749 = vsel %vm506, %v1685, 0.0
        %v1750 = vsel %vm507, %v1686, 0.0
        %v1751 = vsel %vm508, %v1687, 0.0
        %v1784 = vrot.slane %v1724, 7
        %v1785 = vsel %vm638, %v1784, %v1720
        %v1786 = vrot.slane %v1728, 6
        %v1787 = vsel %vm641, %v1786, %v1785
        %v1788 = vrot.slane %v1732, 5
        %v1789 = vsel %vm644, %v1788, %v1787
        %v1790 = vrot.slane %v1736, 4
        %v1791 = vsel %vm647, %v1790, %v1789
        %v1792 = vrot.slane %v1740, 3
        %v1793 = vsel %vm650, %v1792, %v1791
        %v1794 = vrot.slane %v1744, 2
        %v1795 = vsel %vm653, %v1794, %v1793
        %v1796 = vrot.slane %v1748, 1
        %v1797 = vsel %vm656, %v1796, %v1795
        %v1798 = vrot.slane %v1725, 7
        %v1799 = vsel %vm638, %v1798, %v1721
        %v1800 = vrot.slane %v1729, 6
        %v1801 = vsel %vm641, %v1800, %v1799
        %v1802 = vrot.slane %v1733, 5
        %v1803 = vsel %vm644, %v1802, %v1801
        %v1804 = vrot.slane %v1737, 4
        %v1805 = vsel %vm647, %v1804, %v1803
        %v1806 = vrot.slane %v1741, 3
        %v1807 = vsel %vm650, %v1806, %v1805
        %v1808 = vrot.slane %v1745, 2
        %v1809 = vsel %vm653, %v1808, %v1807
        %v1810 = vrot.slane %v1749, 1
        %v1811 = vsel %vm656, %v1810, %v1809
        %v1812 = vrot.slane %v1726, 7
        %v1813 = vsel %vm638, %v1812, %v1722
        %v1814 = vrot.slane %v1730, 6
        %v1815 = vsel %vm641, %v1814, %v1813
        %v1816 = vrot.slane %v1734, 5
        %v1817 = vsel %vm644, %v1816, %v1815
        %v1818 = vrot.slane %v1738, 4
        %v1819 = vsel %vm647, %v1818, %v1817
        %v1820 = vrot.slane %v1742, 3
        %v1821 = vsel %vm650, %v1820, %v1819
        %v1822 = vrot.slane %v1746, 2
        %v1823 = vsel %vm653, %v1822, %v1821
        %v1824 = vrot.slane %v1750, 1
        %v1825 = vsel %vm656, %v1824, %v1823
        %v1826 = vrot.slane %v1727, 7
        %v1827 = vsel %vm638, %v1826, %v1723
        %v1828 = vrot.slane %v1731, 6
        %v1829 = vsel %vm641, %v1828, %v1827
        %v1830 = vrot.slane %v1735, 5
        %v1831 = vsel %vm644, %v1830, %v1829
        %v1832 = vrot.slane %v1739, 4
        %v1833 = vsel %vm647, %v1832, %v1831
        %v1834 = vrot.slane %v1743, 3
        %v1835 = vsel %vm650, %v1834, %v1833
        %v1836 = vrot.slane %v1747, 2
        %v1837 = vsel %vm653, %v1836, %v1835
        %v1838 = vrot.slane %v1751, 1
        %v1839 = vsel %vm656, %v1838, %v1837
        %1844 = vst [vmem:[#allocation3 + $0x20] sm:$0xff] %v1797
        %1845 = vst [vmem:[#allocation3 + $0x28] sm:$0xff] %v1811
        %1846 = vst [vmem:[#allocation3 + $0x30] sm:$0xff] %v1825
        %1847 = vst [vmem:[#allocation3 + $0x38] sm:$0xff] %v1839
        %1848 = vrot.lane.b32.xlu0 %v1620, 15
        %v1849 = vpop.permute.xlu0 %1848
        %1850 = vrot.lane.b32.xlu0 %v1621, 15
        %v1851 = vpop.permute.xlu0 %1850
        %1852 = vrot.lane.b32.xlu0 %v1622, 15
        %v1853 = vpop.permute.xlu0 %1852
        %1854 = vrot.lane.b32.xlu0 %v1623, 15
        %v1855 = vpop.permute.xlu0 %1854
        %v1856 = vsel %vm716, %v1853, %v1855
        %v1857 = vsel %vm716, %v1851, %v1853
        %v1858 = vsel %vm716, %v1849, %v1851
        %v1859 = vsel %vm716, %v1855, %v1849
        %v1860 = vsel %vm741, %v1859, 0.0
        %v1861 = vsel %vm742, %v1858, 0.0
        %v1862 = vsel %vm743, %v1857, 0.0
        %v1863 = vsel %vm744, %v1856, 0.0
        %1864 = vst [vmem:[#allocation3 + $0x40] sm:$0xff] %v1860
        %1865 = vst [vmem:[#allocation3 + $0x48] sm:$0xff] %v1861
        %1866 = vst [vmem:[#allocation3 + $0x50] sm:$0xff] %v1862
        %1867 = vst [vmem:[#allocation3 + $0x58] sm:$0xff] %v1863
        %1868 = vrot.lane.b32.xlu0 %v1620, 1
        %v1869 = vpop.permute.xlu0 %1868
        %1870 = vrot.lane.b32.xlu0 %v1621, 1
        %v1871 = vpop.permute.xlu0 %1870
        %1872 = vrot.lane.b32.xlu0 %v1622, 1
        %v1873 = vpop.permute.xlu0 %1872
        %1874 = vrot.lane.b32.xlu0 %v1623, 1
        %v1875 = vpop.permute.xlu0 %1874
        %v1876 = vsel %vm761, %v1873, %v1875
        %v1877 = vsel %vm761, %v1871, %v1873
        %v1878 = vsel %vm761, %v1869, %v1871
        %v1879 = vsel %vm761, %v1875, %v1869
        %v1884 = vrot.slane %v1879, 6
        %v1885 = vrot.slane %v1878, 6
        %v1886 = vrot.slane %v1877, 6
        %v1887 = vrot.slane %v1876, 6
        %v1888 = vrot.slane %v1879, 7
        %v1889 = vrot.slane %v1878, 7
        %v1890 = vrot.slane %v1877, 7
        %v1891 = vrot.slane %v1876, 7
        %v1892 = vrot.slane %v1879, 1
        %v1893 = vrot.slane %v1878, 1
        %v1894 = vrot.slane %v1877, 1
        %v1895 = vrot.slane %v1876, 1
        %v1896 = vrot.slane %v1879, 2
        %v1897 = vrot.slane %v1878, 2
        %v1898 = vrot.slane %v1877, 2
        %v1899 = vrot.slane %v1876, 2
        %v1900 = vrot.slane %v1879, 3
        %v1901 = vrot.slane %v1878, 3
        %v1902 = vrot.slane %v1877, 3
        %v1903 = vrot.slane %v1876, 3
        %v1904 = vrot.slane %v1879, 4
        %v1905 = vrot.slane %v1878, 4
        %v1906 = vrot.slane %v1877, 4
        %v1907 = vrot.slane %v1876, 4
        %v1908 = vrot.slane %v1879, 5
        %v1909 = vrot.slane %v1878, 5
        %v1910 = vrot.slane %v1877, 5
        %v1911 = vrot.slane %v1876, 5
        %v1944 = vsel %vm505, %v1884, 0.0
        %v1945 = vsel %vm506, %v1885, 0.0
        %v1946 = vsel %vm507, %v1886, 0.0
        %v1947 = vsel %vm508, %v1887, 0.0
        %v1948 = vsel %vm505, %v1888, 0.0
        %v1949 = vsel %vm506, %v1889, 0.0
        %v1950 = vsel %vm507, %v1890, 0.0
        %v1951 = vsel %vm508, %v1891, 0.0
        %v1952 = vsel %vm505, %v1879, 0.0
        %v1953 = vsel %vm506, %v1878, 0.0
        %v1954 = vsel %vm507, %v1877, 0.0
        %v1955 = vsel %vm508, %v1876, 0.0
        %v1956 = vsel %vm505, %v1892, 0.0
        %v1957 = vsel %vm506, %v1893, 0.0
        %v1958 = vsel %vm507, %v1894, 0.0
        %v1959 = vsel %vm508, %v1895, 0.0
        %v1960 = vsel %vm505, %v1896, 0.0
        %v1961 = vsel %vm506, %v1897, 0.0
        %v1962 = vsel %vm507, %v1898, 0.0
        %v1963 = vsel %vm508, %v1899, 0.0
        %v1964 = vsel %vm505, %v1900, 0.0
        %v1965 = vsel %vm506, %v1901, 0.0
        %v1966 = vsel %vm507, %v1902, 0.0
        %v1967 = vsel %vm508, %v1903, 0.0
        %v1968 = vsel %vm505, %v1904, 0.0
        %v1969 = vsel %vm506, %v1905, 0.0
        %v1970 = vsel %vm507, %v1906, 0.0
        %v1971 = vsel %vm508, %v1907, 0.0
        %v1972 = vsel %vm505, %v1908, 0.0
        %v1973 = vsel %vm506, %v1909, 0.0
        %v1974 = vsel %vm507, %v1910, 0.0
        %v1975 = vsel %vm508, %v1911, 0.0
        %v2008 = vrot.slane %v1944, 2
        %v2009 = vrot.slane %v1948, 1
        %v2010 = vsel %vm638, %v2009, %v2008
        %v2011 = vsel %vm641, %v1952, %v2010
        %v2012 = vrot.slane %v1956, 7
        %v2013 = vsel %vm644, %v2012, %v2011
        %v2014 = vrot.slane %v1960, 6
        %v2015 = vsel %vm647, %v2014, %v2013
        %v2016 = vrot.slane %v1964, 5
        %v2017 = vsel %vm650, %v2016, %v2015
        %v2018 = vrot.slane %v1968, 4
        %v2019 = vsel %vm653, %v2018, %v2017
        %v2020 = vrot.slane %v1972, 3
        %v2021 = vsel %vm656, %v2020, %v2019
        %v2022 = vrot.slane %v1945, 2
        %v2023 = vrot.slane %v1949, 1
        %v2024 = vsel %vm638, %v2023, %v2022
        %v2025 = vsel %vm641, %v1953, %v2024
        %v2026 = vrot.slane %v1957, 7
        %v2027 = vsel %vm644, %v2026, %v2025
        %v2028 = vrot.slane %v1961, 6
        %v2029 = vsel %vm647, %v2028, %v2027
        %v2030 = vrot.slane %v1965, 5
        %v2031 = vsel %vm650, %v2030, %v2029
        %v2032 = vrot.slane %v1969, 4
        %v2033 = vsel %vm653, %v2032, %v2031
        %v2034 = vrot.slane %v1973, 3
        %v2035 = vsel %vm656, %v2034, %v2033
        %v2036 = vrot.slane %v1946, 2
        %v2037 = vrot.slane %v1950, 1
        %v2038 = vsel %vm638, %v2037, %v2036
        %v2039 = vsel %vm641, %v1954, %v2038
        %v2040 = vrot.slane %v1958, 7
        %v2041 = vsel %vm644, %v2040, %v2039
        %v2042 = vrot.slane %v1962, 6
        %v2043 = vsel %vm647, %v2042, %v2041
        %v2044 = vrot.slane %v1966, 5
        %v2045 = vsel %vm650, %v2044, %v2043
        %v2046 = vrot.slane %v1970, 4
        %v2047 = vsel %vm653, %v2046, %v2045
        %v2048 = vrot.slane %v1974, 3
        %v2049 = vsel %vm656, %v2048, %v2047
        %v2050 = vrot.slane %v1947, 2
        %v2051 = vrot.slane %v1951, 1
        %v2052 = vsel %vm638, %v2051, %v2050
        %v2053 = vsel %vm641, %v1955, %v2052
        %v2054 = vrot.slane %v1959, 7
        %v2055 = vsel %vm644, %v2054, %v2053
        %v2056 = vrot.slane %v1963, 6
        %v2057 = vsel %vm647, %v2056, %v2055
        %v2058 = vrot.slane %v1967, 5
        %v2059 = vsel %vm650, %v2058, %v2057
        %v2060 = vrot.slane %v1971, 4
        %v2061 = vsel %vm653, %v2060, %v2059
        %v2062 = vrot.slane %v1975, 3
        %v2063 = vsel %vm656, %v2062, %v2061
        %2068 = vst [vmem:[#allocation3 + $0x60] sm:$0xff] %v2021
        %2069 = vst [vmem:[#allocation3 + $0x68] sm:$0xff] %v2035
        %2070 = vst [vmem:[#allocation3 + $0x70] sm:$0xff] %v2049
        %2071 = vst [vmem:[#allocation3 + $0x78] sm:$0xff] %v2063
        %2072 = vst [vmem:[#allocation3 + $0x80] sm:$0xff] %v1620
        %2073 = vst [vmem:[#allocation3 + $0x88] sm:$0xff] %v1621
        %2074 = vst [vmem:[#allocation3 + $0x90] sm:$0xff] %v1622
        %2075 = vst [vmem:[#allocation3 + $0x98] sm:$0xff] %v1623
        %2076 = vrot.lane.b32.xlu0 %v1620, 127
        %v2077 = vpop.permute.xlu0 %2076
        %2078 = vrot.lane.b32.xlu0 %v1621, 127
        %v2079 = vpop.permute.xlu0 %2078
        %2080 = vrot.lane.b32.xlu0 %v1622, 127
        %v2081 = vpop.permute.xlu0 %2080
        %2082 = vrot.lane.b32.xlu0 %v1623, 127
        %v2083 = vpop.permute.xlu0 %2082
        %v2084 = vsel %vm970, %v2081, %v2083
        %v2085 = vsel %vm970, %v2079, %v2081
        %v2086 = vsel %vm970, %v2077, %v2079
        %v2087 = vsel %vm970, %v2083, %v2077
        %v2092 = vrot.slane %v2086, 5
        %v2093 = vrot.slane %v2085, 5
        %v2094 = vrot.slane %v2084, 5
        %v2095 = vrot.slane %v2087, 5
        %v2096 = vrot.slane %v2086, 6
        %v2097 = vrot.slane %v2085, 6
        %v2098 = vrot.slane %v2084, 6
        %v2099 = vrot.slane %v2087, 6
        %v2100 = vrot.slane %v2086, 7
        %v2101 = vrot.slane %v2085, 7
        %v2102 = vrot.slane %v2084, 7
        %v2103 = vrot.slane %v2087, 7
        %v2104 = vrot.slane %v2086, 1
        %v2105 = vrot.slane %v2085, 1
        %v2106 = vrot.slane %v2084, 1
        %v2107 = vrot.slane %v2087, 1
        %v2108 = vrot.slane %v2086, 2
        %v2109 = vrot.slane %v2085, 2
        %v2110 = vrot.slane %v2084, 2
        %v2111 = vrot.slane %v2087, 2
        %v2112 = vrot.slane %v2086, 3
        %v2113 = vrot.slane %v2085, 3
        %v2114 = vrot.slane %v2084, 3
        %v2115 = vrot.slane %v2087, 3
        %v2116 = vrot.slane %v2086, 4
        %v2117 = vrot.slane %v2085, 4
        %v2118 = vrot.slane %v2084, 4
        %v2119 = vrot.slane %v2087, 4
        %v2152 = vsel %vm505, %v2092, 0.0
        %v2153 = vsel %vm506, %v2093, 0.0
        %v2154 = vsel %vm507, %v2094, 0.0
        %v2155 = vsel %vm508, %v2095, 0.0
        %v2156 = vsel %vm505, %v2096, 0.0
        %v2157 = vsel %vm506, %v2097, 0.0
        %v2158 = vsel %vm507, %v2098, 0.0
        %v2159 = vsel %vm508, %v2099, 0.0
        %v2160 = vsel %vm505, %v2100, 0.0
        %v2161 = vsel %vm506, %v2101, 0.0
        %v2162 = vsel %vm507, %v2102, 0.0
        %v2163 = vsel %vm508, %v2103, 0.0
        %v2164 = vsel %vm505, %v2086, 0.0
        %v2165 = vsel %vm506, %v2085, 0.0
        %v2166 = vsel %vm507, %v2084, 0.0
        %v2167 = vsel %vm508, %v2087, 0.0
        %v2168 = vsel %vm505, %v2104, 0.0
        %v2169 = vsel %vm506, %v2105, 0.0
        %v2170 = vsel %vm507, %v2106, 0.0
        %v2171 = vsel %vm508, %v2107, 0.0
        %v2172 = vsel %vm505, %v2108, 0.0
        %v2173 = vsel %vm506, %v2109, 0.0
        %v2174 = vsel %vm507, %v2110, 0.0
        %v2175 = vsel %vm508, %v2111, 0.0
        %v2176 = vsel %vm505, %v2112, 0.0
        %v2177 = vsel %vm506, %v2113, 0.0
        %v2178 = vsel %vm507, %v2114, 0.0
        %v2179 = vsel %vm508, %v2115, 0.0
        %v2180 = vsel %vm505, %v2116, 0.0
        %v2181 = vsel %vm506, %v2117, 0.0
        %v2182 = vsel %vm507, %v2118, 0.0
        %v2183 = vsel %vm508, %v2119, 0.0
        %v2216 = vrot.slane %v2152, 3
        %v2217 = vrot.slane %v2156, 2
        %v2218 = vsel %vm638, %v2217, %v2216
        %v2219 = vrot.slane %v2160, 1
        %v2220 = vsel %vm641, %v2219, %v2218
        %v2221 = vsel %vm644, %v2164, %v2220
        %v2222 = vrot.slane %v2168, 7
        %v2223 = vsel %vm647, %v2222, %v2221
        %v2224 = vrot.slane %v2172, 6
        %v2225 = vsel %vm650, %v2224, %v2223
        %v2226 = vrot.slane %v2176, 5
        %v2227 = vsel %vm653, %v2226, %v2225
        %v2228 = vrot.slane %v2180, 4
        %v2229 = vsel %vm656, %v2228, %v2227
        %v2230 = vrot.slane %v2153, 3
        %v2231 = vrot.slane %v2157, 2
        %v2232 = vsel %vm638, %v2231, %v2230
        %v2233 = vrot.slane %v2161, 1
        %v2234 = vsel %vm641, %v2233, %v2232
        %v2235 = vsel %vm644, %v2165, %v2234
        %v2236 = vrot.slane %v2169, 7
        %v2237 = vsel %vm647, %v2236, %v2235
        %v2238 = vrot.slane %v2173, 6
        %v2239 = vsel %vm650, %v2238, %v2237
        %v2240 = vrot.slane %v2177, 5
        %v2241 = vsel %vm653, %v2240, %v2239
        %v2242 = vrot.slane %v2181, 4
        %v2243 = vsel %vm656, %v2242, %v2241
        %v2244 = vrot.slane %v2154, 3
        %v2245 = vrot.slane %v2158, 2
        %v2246 = vsel %vm638, %v2245, %v2244
        %v2247 = vrot.slane %v2162, 1
        %v2248 = vsel %vm641, %v2247, %v2246
        %v2249 = vsel %vm644, %v2166, %v2248
        %v2250 = vrot.slane %v2170, 7
        %v2251 = vsel %vm647, %v2250, %v2249
        %v2252 = vrot.slane %v2174, 6
        %v2253 = vsel %vm650, %v2252, %v2251
        %v2254 = vrot.slane %v2178, 5
        %v2255 = vsel %vm653, %v2254, %v2253
        %v2256 = vrot.slane %v2182, 4
        %v2257 = vsel %vm656, %v2256, %v2255
        %v2258 = vrot.slane %v2155, 3
        %v2259 = vrot.slane %v2159, 2
        %v2260 = vsel %vm638, %v2259, %v2258
        %v2261 = vrot.slane %v2163, 1
        %v2262 = vsel %vm641, %v2261, %v2260
        %v2263 = vsel %vm644, %v2167, %v2262
        %v2264 = vrot.slane %v2171, 7
        %v2265 = vsel %vm647, %v2264, %v2263
        %v2266 = vrot.slane %v2175, 6
        %v2267 = vsel %vm650, %v2266, %v2265
        %v2268 = vrot.slane %v2179, 5
        %v2269 = vsel %vm653, %v2268, %v2267
        %v2270 = vrot.slane %v2183, 4
        %v2271 = vsel %vm656, %v2270, %v2269
        %2276 = vst [vmem:[#allocation3 + $0xa0] sm:$0xff] %v2229
        %2277 = vst [vmem:[#allocation3 + $0xa8] sm:$0xff] %v2243
        %2278 = vst [vmem:[#allocation3 + $0xb0] sm:$0xff] %v2257
        %2279 = vst [vmem:[#allocation3 + $0xb8] sm:$0xff] %v2271
        %2280 = vrot.lane.b32.xlu0 %v1620, 113
        %v2281 = vpop.permute.xlu0 %2280
        %2282 = vrot.lane.b32.xlu0 %v1621, 113
        %v2283 = vpop.permute.xlu0 %2282
        %2284 = vrot.lane.b32.xlu0 %v1622, 113
        %v2285 = vpop.permute.xlu0 %2284
        %2286 = vrot.lane.b32.xlu0 %v1623, 113
        %v2287 = vpop.permute.xlu0 %2286
        %v2288 = vsel %vm1175, %v2285, %v2287
        %v2289 = vsel %vm1175, %v2283, %v2285
        %v2290 = vsel %vm1175, %v2281, %v2283
        %v2291 = vsel %vm1175, %v2287, %v2281
        %v2292 = vsel %vm1200, %v2290, 0.0
        %v2293 = vsel %vm1201, %v2289, 0.0
        %v2294 = vsel %vm1202, %v2288, 0.0
        %v2295 = vsel %vm1203, %v2291, 0.0
        %2296 = vst [vmem:[#allocation3 + $0xc0] sm:$0xff] %v2292
        %2297 = vst [vmem:[#allocation3 + $0xc8] sm:$0xff] %v2293
        %2298 = vst [vmem:[#allocation3 + $0xd0] sm:$0xff] %v2294
        %2299 = vst [vmem:[#allocation3 + $0xd8] sm:$0xff] %v2295
        %2300 = vrot.lane.b32.xlu0 %v1620, 112
        %v2301 = vpop.permute.xlu0 %2300
        %2302 = vrot.lane.b32.xlu0 %v1621, 112
        %v2303 = vpop.permute.xlu0 %2302
        %2304 = vrot.lane.b32.xlu0 %v1622, 112
        %v2305 = vpop.permute.xlu0 %2304
        %2306 = vrot.lane.b32.xlu0 %v1623, 112
        %v2307 = vpop.permute.xlu0 %2306
        %v2308 = vsel %vm1220, %v2305, %v2307
        %v2309 = vsel %vm1220, %v2303, %v2305
        %v2310 = vsel %vm1220, %v2301, %v2303
        %v2311 = vsel %vm1220, %v2307, %v2301
        %v2316 = vrot.slane %v2310, 7
        %v2317 = vrot.slane %v2309, 7
        %v2318 = vrot.slane %v2308, 7
        %v2319 = vrot.slane %v2311, 7
        %v2320 = vrot.slane %v2310, 1
        %v2321 = vrot.slane %v2309, 1
        %v2322 = vrot.slane %v2308, 1
        %v2323 = vrot.slane %v2311, 1
        %v2324 = vrot.slane %v2310, 2
        %v2325 = vrot.slane %v2309, 2
        %v2326 = vrot.slane %v2308, 2
        %v2327 = vrot.slane %v2311, 2
        %v2328 = vrot.slane %v2310, 3
        %v2329 = vrot.slane %v2309, 3
        %v2330 = vrot.slane %v2308, 3
        %v2331 = vrot.slane %v2311, 3
        %v2332 = vrot.slane %v2310, 4
        %v2333 = vrot.slane %v2309, 4
        %v2334 = vrot.slane %v2308, 4
        %v2335 = vrot.slane %v2311, 4
        %v2336 = vrot.slane %v2310, 5
        %v2337 = vrot.slane %v2309, 5
        %v2338 = vrot.slane %v2308, 5
        %v2339 = vrot.slane %v2311, 5
        %v2340 = vrot.slane %v2310, 6
        %v2341 = vrot.slane %v2309, 6
        %v2342 = vrot.slane %v2308, 6
        %v2343 = vrot.slane %v2311, 6
        %v2376 = vsel %vm505, %v2316, 0.0
        %v2377 = vsel %vm506, %v2317, 0.0
        %v2378 = vsel %vm507, %v2318, 0.0
        %v2379 = vsel %vm508, %v2319, 0.0
        %v2380 = vsel %vm505, %v2310, 0.0
        %v2381 = vsel %vm506, %v2309, 0.0
        %v2382 = vsel %vm507, %v2308, 0.0
        %v2383 = vsel %vm508, %v2311, 0.0
        %v2384 = vsel %vm505, %v2320, 0.0
        %v2385 = vsel %vm506, %v2321, 0.0
        %v2386 = vsel %vm507, %v2322, 0.0
        %v2387 = vsel %vm508, %v2323, 0.0
        %v2388 = vsel %vm505, %v2324, 0.0
        %v2389 = vsel %vm506, %v2325, 0.0
        %v2390 = vsel %vm507, %v2326, 0.0
        %v2391 = vsel %vm508, %v2327, 0.0
        %v2392 = vsel %vm505, %v2328, 0.0
        %v2393 = vsel %vm506, %v2329, 0.0
        %v2394 = vsel %vm507, %v2330, 0.0
        %v2395 = vsel %vm508, %v2331, 0.0
        %v2396 = vsel %vm505, %v2332, 0.0
        %v2397 = vsel %vm506, %v2333, 0.0
        %v2398 = vsel %vm507, %v2334, 0.0
        %v2399 = vsel %vm508, %v2335, 0.0
        %v2400 = vsel %vm505, %v2336, 0.0
        %v2401 = vsel %vm506, %v2337, 0.0
        %v2402 = vsel %vm507, %v2338, 0.0
        %v2403 = vsel %vm508, %v2339, 0.0
        %v2404 = vsel %vm505, %v2340, 0.0
        %v2405 = vsel %vm506, %v2341, 0.0
        %v2406 = vsel %vm507, %v2342, 0.0
        %v2407 = vsel %vm508, %v2343, 0.0
        %v2440 = vrot.slane %v2376, 1
        %v2441 = vsel %vm638, %v2380, %v2440
        %v2442 = vrot.slane %v2384, 7
        %v2443 = vsel %vm641, %v2442, %v2441
        %v2444 = vrot.slane %v2388, 6
        %v2445 = vsel %vm644, %v2444, %v2443
        %v2446 = vrot.slane %v2392, 5
        %v2447 = vsel %vm647, %v2446, %v2445
        %v2448 = vrot.slane %v2396, 4
        %v2449 = vsel %vm650, %v2448, %v2447
        %v2450 = vrot.slane %v2400, 3
        %v2451 = vsel %vm653, %v2450, %v2449
        %v2452 = vrot.slane %v2404, 2
        %v2453 = vsel %vm656, %v2452, %v2451
        %v2454 = vrot.slane %v2377, 1
        %v2455 = vsel %vm638, %v2381, %v2454
        %v2456 = vrot.slane %v2385, 7
        %v2457 = vsel %vm641, %v2456, %v2455
        %v2458 = vrot.slane %v2389, 6
        %v2459 = vsel %vm644, %v2458, %v2457
        %v2460 = vrot.slane %v2393, 5
        %v2461 = vsel %vm647, %v2460, %v2459
        %v2462 = vrot.slane %v2397, 4
        %v2463 = vsel %vm650, %v2462, %v2461
        %v2464 = vrot.slane %v2401, 3
        %v2465 = vsel %vm653, %v2464, %v2463
        %v2466 = vrot.slane %v2405, 2
        %v2467 = vsel %vm656, %v2466, %v2465
        %v2468 = vrot.slane %v2378, 1
        %v2469 = vsel %vm638, %v2382, %v2468
        %v2470 = vrot.slane %v2386, 7
        %v2471 = vsel %vm641, %v2470, %v2469
        %v2472 = vrot.slane %v2390, 6
        %v2473 = vsel %vm644, %v2472, %v2471
        %v2474 = vrot.slane %v2394, 5
        %v2475 = vsel %vm647, %v2474, %v2473
        %v2476 = vrot.slane %v2398, 4
        %v2477 = vsel %vm650, %v2476, %v2475
        %v2478 = vrot.slane %v2402, 3
        %v2479 = vsel %vm653, %v2478, %v2477
        %v2480 = vrot.slane %v2406, 2
        %v2481 = vsel %vm656, %v2480, %v2479
        %v2482 = vrot.slane %v2379, 1
        %v2483 = vsel %vm638, %v2383, %v2482
        %v2484 = vrot.slane %v2387, 7
        %v2485 = vsel %vm641, %v2484, %v2483
        %v2486 = vrot.slane %v2391, 6
        %v2487 = vsel %vm644, %v2486, %v2485
        %v2488 = vrot.slane %v2395, 5
        %v2489 = vsel %vm647, %v2488, %v2487
        %v2490 = vrot.slane %v2399, 4
        %v2491 = vsel %vm650, %v2490, %v2489
        %v2492 = vrot.slane %v2403, 3
        %v2493 = vsel %vm653, %v2492, %v2491
        %v2494 = vrot.slane %v2407, 2
        %v2495 = vsel %vm656, %v2494, %v2493
        %2500 = vst [vmem:[#allocation3 + $0xe0] sm:$0xff] %v2453
        %2501 = vst [vmem:[#allocation3 + $0xe8] sm:$0xff] %v2467
        %2502 = vst [vmem:[#allocation3 + $0xf0] sm:$0xff] %v2481
        %2503 = vst [vmem:[#allocation3 + $0xf8] sm:$0xff] %v2495
        %2504 = vrot.lane.b32.xlu0 %v1620, 111
        %v2505 = vpop.permute.xlu0 %2504
        %2506 = vrot.lane.b32.xlu0 %v1621, 111
        %v2507 = vpop.permute.xlu0 %2506
        %2508 = vrot.lane.b32.xlu0 %v1622, 111
        %v2509 = vpop.permute.xlu0 %2508
        %2510 = vrot.lane.b32.xlu0 %v1623, 111
        %v2511 = vpop.permute.xlu0 %2510
        %v2512 = vsel %vm1425, %v2509, %v2511
        %v2513 = vsel %vm1425, %v2507, %v2509
        %v2514 = vsel %vm1425, %v2505, %v2507
        %v2515 = vsel %vm1425, %v2511, %v2505
        %v2516 = vsel %vm1446, %v2514, 0.0
        %v2517 = vsel %vm1447, %v2513, 0.0
        %v2518 = vsel %vm1448, %v2512, 0.0
        %v2519 = vsel %vm1449, %v2515, 0.0
        %2520 = vst [vmem:[#allocation3 + $0x100] sm:$0xff] %v2516
        %2521 = vst [vmem:[#allocation3 + $0x108] sm:$0xff] %v2517
        %2522 = vst [vmem:[#allocation3 + $0x110] sm:$0xff] %v2518
        %2523 = vst [vmem:[#allocation3 + $0x118] sm:$0xff] %v2519
        %v2524 = vld [vmem:[%s378] sm:$0xf]
        %v2525 = vld [vmem:[%s378 + $0x4] sm:$0xf]
        %v2526 = vld [vmem:[%s378 + $0x8] sm:$0xf]
        %v2527 = vld [vmem:[%s378 + $0xc] sm:$0xf]
        %v2528 = vld [vmem:[%s378 + $0x10] sm:$0xf]
        %v2529 = vld [vmem:[%s378 + $0x14] sm:$0xf]
        %v2530 = vld [vmem:[#allocation3] sm:$0xff]
        %v2531 = vld [vmem:[#allocation3 + $0x8] sm:$0xff]
        %v2532 = vld [vmem:[#allocation3 + $0x10] sm:$0xff]
        %v2533 = vld [vmem:[#allocation3 + $0x18] sm:$0xff]
        %v2534 = vld [vmem:[#allocation3 + $0x20] sm:$0xff]
        %v2535 = vld [vmem:[#allocation3 + $0x28] sm:$0xff]
        %v2536 = vld [vmem:[#allocation3 + $0x30] sm:$0xff]
        %v2537 = vld [vmem:[#allocation3 + $0x38] sm:$0xff]
        %v2538 = vld [vmem:[#allocation3 + $0x40] sm:$0xff]
        %v2539 = vld [vmem:[#allocation3 + $0x48] sm:$0xff]
        %v2540 = vld [vmem:[#allocation3 + $0x50] sm:$0xff]
        %v2541 = vld [vmem:[#allocation3 + $0x58] sm:$0xff]
        %v2542 = vld [vmem:[#allocation3 + $0x60] sm:$0xff]
        %v2543 = vld [vmem:[#allocation3 + $0x68] sm:$0xff]
        %v2544 = vld [vmem:[#allocation3 + $0x70] sm:$0xff]
        %v2545 = vld [vmem:[#allocation3 + $0x78] sm:$0xff]
        %v2546 = vld [vmem:[#allocation3 + $0x80] sm:$0xff]
        %v2547 = vld [vmem:[#allocation3 + $0x88] sm:$0xff]
        %v2548 = vld [vmem:[#allocation3 + $0x90] sm:$0xff]
        %v2549 = vld [vmem:[#allocation3 + $0x98] sm:$0xff]
        %v2550 = vld [vmem:[#allocation3 + $0xa0] sm:$0xff]
        %v2551 = vld [vmem:[#allocation3 + $0xa8] sm:$0xff]
        %v2552 = vld [vmem:[#allocation3 + $0xb0] sm:$0xff]
        %v2553 = vld [vmem:[#allocation3 + $0xb8] sm:$0xff]
        %v2554 = vld [vmem:[#allocation3 + $0xc0] sm:$0xff]
        %v2555 = vld [vmem:[#allocation3 + $0xc8] sm:$0xff]
        %v2556 = vld [vmem:[#allocation3 + $0xd0] sm:$0xff]
        %v2557 = vld [vmem:[#allocation3 + $0xd8] sm:$0xff]
        %v2558 = vld [vmem:[#allocation3 + $0xe0] sm:$0xff]
        %v2559 = vld [vmem:[#allocation3 + $0xe8] sm:$0xff]
        %v2560 = vld [vmem:[#allocation3 + $0xf0] sm:$0xff]
        %v2561 = vld [vmem:[#allocation3 + $0xf8] sm:$0xff]
        %v2562 = vld [vmem:[#allocation3 + $0x100] sm:$0xff]
        %v2563 = vld [vmem:[#allocation3 + $0x108] sm:$0xff]
        %v2564 = vld [vmem:[#allocation3 + $0x110] sm:$0xff]
        %v2565 = vld [vmem:[#allocation3 + $0x118] sm:$0xff]
        %v2566 = vpack.c.bf16 %v2534, %v2530
        %v2567 = vpack.c.bf16 %v2535, %v2531
        %v2568 = vpack.c.bf16 %v2536, %v2532
        %v2569 = vpack.c.bf16 %v2537, %v2533
        %v2570 = vpack.c.bf16 %v2542, %v2538
        %v2571 = vpack.c.bf16 %v2543, %v2539
        %v2572 = vpack.c.bf16 %v2544, %v2540
        %v2573 = vpack.c.bf16 %v2545, %v2541
        %v2574 = vpack.c.bf16 %v2550, %v2546
        %v2575 = vpack.c.bf16 %v2551, %v2547
        %v2576 = vpack.c.bf16 %v2552, %v2548
        %v2577 = vpack.c.bf16 %v2553, %v2549
        %v2578 = vpack.c.bf16 %v2558, %v2554
        %v2579 = vpack.c.bf16 %v2559, %v2555
        %v2580 = vpack.c.bf16 %v2560, %v2556
        %v2581 = vpack.c.bf16 %v2561, %v2557
        %v2582 = vpack.c.bf16 %v2562, %v2562
        %v2583 = vpack.c.bf16 %v2563, %v2563
        %v2584 = vpack.c.bf16 %v2564, %v2564
        %v2585 = vpack.c.bf16 %v2565, %v2565
        %v2586 = vld [vmem:[%s383] sm:$0xff]
        %v2587 = vld [vmem:[%s383 + $0x8] sm:$0xff]
        %v2588 = vld [vmem:[%s383 + $0x10] sm:$0xff]
        %v2589 = vld [vmem:[%s383 + $0x18] sm:$0xff]
        %v2590 = vld [vmem:[%s383 + $0x20] sm:$0xff]
        %v2591 = vld [vmem:[%s383 + $0x28] sm:$0xff]
        %2593 = vset.pattern.permute.xlu0 0
        %2594 = vperm.xlu0 %2593, %v2586
        %v2595 = vpop.permute.xlu0 %2594
        %2598 = vset.pattern.permute.xlu0 0
        %2599 = vperm.xlu0 %2598, %v2587
        %v2600 = vpop.permute.xlu0 %2599
        %2603 = vset.pattern.permute.xlu0 0
        %2604 = vperm.xlu0 %2603, %v2588
        %v2605 = vpop.permute.xlu0 %2604
        %2608 = vset.pattern.permute.xlu0 0
        %2609 = vperm.xlu0 %2608, %v2589
        %v2610 = vpop.permute.xlu0 %2609
        %2613 = vset.pattern.permute.xlu0 0
        %2614 = vperm.xlu0 %2613, %v2590
        %v2615 = vpop.permute.xlu0 %2614
        %2618 = vset.pattern.permute.xlu0 0
        %2619 = vperm.xlu0 %2618, %v2591
        %v2620 = vpop.permute.xlu0 %2619
        %v2628 = vunpack.c.l.b16 %v2524
        %v2629 = vunpack.c.l.b16 %v2525
        %v2630 = vunpack.c.l.b16 %v2526
        %v2631 = vunpack.c.l.b16 %v2527
        %v2632 = vunpack.c.l.b16 %v2528
        %v2633 = vunpack.c.l.b16 %v2529
        %v2634 = vpack.c.b16 %v2629, %v2628
        %v2635 = vpack.c.b16 %v2631, %v2630
        %v2636 = vpack.c.b16 %v2633, %v2632
        %v2638 = vsel %vm1521, %v2634, 0
        %v2641 = vsel %vm1521, %v2635, 0
        %v2644 = vsel %vm1521, %v2636, 0
        %v2647 = vsel %vm1525, %v2582, 0
        %v2650 = vsel %vm1525, %v2583, 0
        %v2653 = vsel %vm1525, %v2584, 0
        %v2656 = vsel %vm1525, %v2585, 0
        %2658 = vmatprep.subr.bf16.mxu0 %v2567
        %2659 = vmatpush1.bf16.msra.mxu0 %v2566
        %2660 = vmatprep.subr.bf16.mxu0 %v2571
        %2661 = vmatpush1.bf16.msra.mxu0 %v2570
        %2662 = vmatprep.subr.bf16.mxu0 %v2575
        %2663 = vmatpush1.bf16.msra.mxu0 %v2574
        %2664 = vmatprep.subr.bf16.mxu0 %v2579
        %2665 = vmatpush1.bf16.msra.mxu0 %v2578
        %2666 = vmatprep.subr.bf16.mxu0 %v2650
        %2667 = vmatpush1.bf16.msra.mxu0 %v2647
        %2668 = vmatprep.subr.bf16.mxu0 0
        %2669 = vmatpush1.bf16.msra.mxu0 0
        %2670 = vmatprep.subr.bf16.mxu0 0
        %2671 = vmatpush1.bf16.msra.mxu0 0
        %2672 = vmatprep.subr.bf16.mxu0 0
        %2673 = vmatpush1.bf16.msra.mxu0 0
        %2674 = vmatprep.subr.bf16.mxu0 0
        %2675 = vmatpush1.bf16.msra.mxu0 0
        %2676 = vmatprep.subr.bf16.mxu0 0
        %2677 = vmatpush1.bf16.msra.mxu0 0
        %2678 = vmatprep.subr.bf16.mxu0 0
        %2679 = vmatpush1.bf16.msra.mxu0 0
        %2680 = vmatprep.subr.bf16.mxu0 0
        %2681 = vmatpush1.bf16.msra.mxu0 0
        %2682 = vmatprep.subr.bf16.mxu0 0
        %2683 = vmatpush1.bf16.msra.mxu0 0
        %2684 = vmatprep.subr.bf16.mxu0 0
        %2685 = vmatpush1.bf16.msra.mxu0 0
        %2686 = vmatprep.subr.bf16.mxu0 0
        %2687 = vmatpush1.bf16.msra.mxu0 0
        %2688 = vmatprep.subr.bf16.mxu0 0
        %2689 = vmatpush1.bf16.msra.mxu0 0
        %2690 = vmatprep.mubr.bf16.mxu0 0
        %2691 = vmatmul.mubr.bf16.gmra.mrb[0].mxu0 %v2638
        %v2692 = vpop.f32.mrb[0].mxu0
        %v2693 = vadd.f32 %v2595, %v2692
        %v2694 = vpop.f32.mrb[0].mxu0
        %v2695 = vadd.f32 %v2595, %v2694
        %v2696 = vpop.f32.mrb[0].mxu0
        %v2697 = vadd.f32 %v2600, %v2696
        %v2698 = vpop.f32.mrb[0].mxu0
        %v2699 = vadd.f32 %v2600, %v2698
        %2700 = vmatprep.mubr.bf16.mxu0 0
        %2701 = vmatmul.mubr.bf16.gmra.mrb[0].mxu0 %v2641
        %v2702 = vpop.f32.mrb[0].mxu0
        %v2703 = vadd.f32 %v2605, %v2702
        %v2704 = vpop.f32.mrb[0].mxu0
        %v2705 = vadd.f32 %v2605, %v2704
        %v2706 = vpop.f32.mrb[0].mxu0
        %v2707 = vadd.f32 %v2610, %v2706
        %v2708 = vpop.f32.mrb[0].mxu0
        %v2709 = vadd.f32 %v2610, %v2708
        %2710 = vmatprep.mubr.bf16.mxu0 0
        %2711 = vmatmul.mubr.bf16.gmra.mrb[0].mxu0 %v2644
        %v2712 = vpop.f32.mrb[0].mxu0
        %v2713 = vadd.f32 %v2615, %v2712
        %v2714 = vpop.f32.mrb[0].mxu0
        %v2715 = vadd.f32 %v2615, %v2714
        %v2716 = vpop.f32.mrb[0].mxu0
        %v2717 = vadd.f32 %v2620, %v2716
        %v2718 = vpop.f32.mrb[0].mxu0
        %v2719 = vadd.f32 %v2620, %v2718
        %2720 = vdwg.mxu0
        %2721 = vmatprep.subr.bf16.mxu0 %v2569
        %2722 = vmatpush1.bf16.msra.mxu0 %v2568
        %2723 = vmatprep.subr.bf16.mxu0 %v2573
        %2724 = vmatpush1.bf16.msra.mxu0 %v2572
        %2725 = vmatprep.subr.bf16.mxu0 %v2577
        %2726 = vmatpush1.bf16.msra.mxu0 %v2576
        %2727 = vmatprep.subr.bf16.mxu0 %v2581
        %2728 = vmatpush1.bf16.msra.mxu0 %v2580
        %2729 = vmatprep.subr.bf16.mxu0 %v2656
        %2730 = vmatpush1.bf16.msra.mxu0 %v2653
        %2731 = vmatprep.subr.bf16.mxu0 0
        %2732 = vmatpush1.bf16.msra.mxu0 0
        %2733 = vmatprep.subr.bf16.mxu0 0
        %2734 = vmatpush1.bf16.msra.mxu0 0
        %2735 = vmatprep.subr.bf16.mxu0 0
        %2736 = vmatpush1.bf16.msra.mxu0 0
        %2737 = vmatprep.subr.bf16.mxu0 0
        %2738 = vmatpush1.bf16.msra.mxu0 0
        %2739 = vmatprep.subr.bf16.mxu0 0
        %2740 = vmatpush1.bf16.msra.mxu0 0
        %2741 = vmatprep.subr.bf16.mxu0 0
        %2742 = vmatpush1.bf16.msra.mxu0 0
        %2743 = vmatprep.subr.bf16.mxu0 0
        %2744 = vmatpush1.bf16.msra.mxu0 0
        %2745 = vmatprep.subr.bf16.mxu0 0
        %2746 = vmatpush1.bf16.msra.mxu0 0
        %2747 = vmatprep.subr.bf16.mxu0 0
        %2748 = vmatpush1.bf16.msra.mxu0 0
        %2749 = vmatprep.subr.bf16.mxu0 0
        %2750 = vmatpush1.bf16.msra.mxu0 0
        %2751 = vmatprep.subr.bf16.mxu0 0
        %2752 = vmatpush1.bf16.msra.mxu0 0
        %2753 = vmatprep.mubr.bf16.mxu0 0
        %2754 = vmatmul.mubr.bf16.gmra.mrb[0].mxu0 %v2638
        %v2755 = vpop.f32.mrb[0].mxu0
        %v2756 = vadd.f32 %v2595, %v2755
        %v2757 = vpop.f32.mrb[0].mxu0
        %v2758 = vadd.f32 %v2595, %v2757
        %v2759 = vpop.f32.mrb[0].mxu0
        %v2760 = vadd.f32 %v2600, %v2759
        %v2761 = vpop.f32.mrb[0].mxu0
        %v2762 = vadd.f32 %v2600, %v2761
        %2763 = vmatprep.mubr.bf16.mxu0 0
        %2764 = vmatmul.mubr.bf16.gmra.mrb[0].mxu0 %v2641
        %v2765 = vpop.f32.mrb[0].mxu0
        %v2766 = vadd.f32 %v2605, %v2765
        %v2767 = vpop.f32.mrb[0].mxu0
        %v2768 = vadd.f32 %v2605, %v2767
        %v2769 = vpop.f32.mrb[0].mxu0
        %v2770 = vadd.f32 %v2610, %v2769
        %v2771 = vpop.f32.mrb[0].mxu0
        %v2772 = vadd.f32 %v2610, %v2771
        %2773 = vmatprep.mubr.bf16.mxu0 0
        %2774 = vmatmul.mubr.bf16.gmra.mrb[0].mxu0 %v2644
        %v2775 = vpop.f32.mrb[0].mxu0
        %v2776 = vadd.f32 %v2615, %v2775
        %v2777 = vpop.f32.mrb[0].mxu0
        %v2778 = vadd.f32 %v2615, %v2777
        %v2779 = vpop.f32.mrb[0].mxu0
        %v2780 = vadd.f32 %v2620, %v2779
        %v2781 = vpop.f32.mrb[0].mxu0
        %v2782 = vadd.f32 %v2620, %v2781
        %2783 = vdwg.mxu0
        %v2784 = vmax.f32 %v2693, 0.0
        %v2785 = vmax.f32 %v2695, 0.0
        %v2786 = vmax.f32 %v2756, 0.0
        %v2787 = vmax.f32 %v2758, 0.0
        %v2788 = vmax.f32 %v2697, 0.0
        %v2789 = vmax.f32 %v2699, 0.0
        %v2790 = vmax.f32 %v2760, 0.0
        %v2791 = vmax.f32 %v2762, 0.0
        %v2792 = vmax.f32 %v2703, 0.0
        %v2793 = vmax.f32 %v2705, 0.0
        %v2794 = vmax.f32 %v2766, 0.0
        %v2795 = vmax.f32 %v2768, 0.0
        %v2796 = vmax.f32 %v2707, 0.0
        %v2797 = vmax.f32 %v2709, 0.0
        %v2798 = vmax.f32 %v2770, 0.0
        %v2799 = vmax.f32 %v2772, 0.0
        %v2800 = vmax.f32 %v2713, 0.0
        %v2801 = vmax.f32 %v2715, 0.0
        %v2802 = vmax.f32 %v2776, 0.0
        %v2803 = vmax.f32 %v2778, 0.0
        %v2804 = vmax.f32 %v2717, 0.0
        %v2805 = vmax.f32 %v2719, 0.0
        %v2806 = vmax.f32 %v2780, 0.0
        %v2807 = vmax.f32 %v2782, 0.0
        %v2808 = vld [vmem:[%s387] sm:$0xf]
        %v2809 = vpack.c.bf16 %v2788, %v2784
        %v2810 = vpack.c.bf16 %v2789, %v2785
        %v2811 = vpack.c.bf16 %v2790, %v2786
        %v2812 = vpack.c.bf16 %v2791, %v2787
        %v2813 = vpack.c.bf16 %v2796, %v2792
        %v2814 = vpack.c.bf16 %v2797, %v2793
        %v2815 = vpack.c.bf16 %v2798, %v2794
        %v2816 = vpack.c.bf16 %v2799, %v2795
        %v2817 = vpack.c.bf16 %v2804, %v2800
        %v2818 = vpack.c.bf16 %v2805, %v2801
        %v2819 = vpack.c.bf16 %v2806, %v2802
        %v2820 = vpack.c.bf16 %v2807, %v2803
        %v2821 = vld [vmem:[%s391] sm:$0xff]
        %2823 = vset.pattern.permute.xlu0 0
        %2824 = vperm.xlu0 %2823, %v2821
        %v2825 = vpop.permute.xlu0 %2824
        %vm2827 = vcmask 392192
        %v2829 = vsel %vm2827, %v2808, 0
        %2831 = vmatprep.subr.bf16.mxu0 %v2810
        %2832 = vmatpush1.bf16.msra.mxu0 %v2809
        %2833 = vmatprep.subr.bf16.mxu0 %v2814
        %2834 = vmatpush1.bf16.msra.mxu0 %v2813
        %2835 = vmatprep.subr.bf16.mxu0 %v2818
        %2836 = vmatpush1.bf16.msra.mxu0 %v2817
        %2837 = vmatprep.subr.bf16.mxu0 0
        %2838 = vmatpush1.bf16.msra.mxu0 0
        %2839 = vmatprep.subr.bf16.mxu0 0
        %2840 = vmatpush1.bf16.msra.mxu0 0
        %2841 = vmatprep.subr.bf16.mxu0 0
        %2842 = vmatpush1.bf16.msra.mxu0 0
        %2843 = vmatprep.subr.bf16.mxu0 0
        %2844 = vmatpush1.bf16.msra.mxu0 0
        %2845 = vmatprep.subr.bf16.mxu0 0
        %2846 = vmatpush1.bf16.msra.mxu0 0
        %2847 = vmatprep.subr.bf16.mxu0 0
        %2848 = vmatpush1.bf16.msra.mxu0 0
        %2849 = vmatprep.subr.bf16.mxu0 0
        %2850 = vmatpush1.bf16.msra.mxu0 0
        %2851 = vmatprep.subr.bf16.mxu0 0
        %2852 = vmatpush1.bf16.msra.mxu0 0
        %2853 = vmatprep.subr.bf16.mxu0 0
        %2854 = vmatpush1.bf16.msra.mxu0 0
        %2855 = vmatprep.subr.bf16.mxu0 0
        %2856 = vmatpush1.bf16.msra.mxu0 0
        %2857 = vmatprep.subr.bf16.mxu0 0
        %2858 = vmatpush1.bf16.msra.mxu0 0
        %2859 = vmatprep.subr.bf16.mxu0 0
        %2860 = vmatpush1.bf16.msra.mxu0 0
        %2861 = vmatprep.subr.bf16.mxu0 0
        %2862 = vmatpush1.bf16.msra.mxu0 0
        %2863 = vmatprep.mubr.bf16.mxu0 0
        %2864 = vmatmul.mubr.bf16.gmra.mrb[0].mxu0 %v2829
        %v2865 = vpop.f32.mrb[0].mxu0
        %v2866 = vadd.f32 %v2825, %v2865
        %v2867 = vpop.f32.mrb[0].mxu0
        %v2868 = vadd.f32 %v2825, %v2867
        %v2869 = vpop.f32.mrb[0].mxu0
        %v2870 = vpop.f32.mrb[0].mxu0
        %2871 = vdwg.mxu0
        %2872 = vmatprep.subr.bf16.mxu0 %v2812
        %2873 = vmatpush1.bf16.msra.mxu0 %v2811
        %2874 = vmatprep.subr.bf16.mxu0 %v2816
        %2875 = vmatpush1.bf16.msra.mxu0 %v2815
        %2876 = vmatprep.subr.bf16.mxu0 %v2820
        %2877 = vmatpush1.bf16.msra.mxu0 %v2819
        %2878 = vmatprep.subr.bf16.mxu0 0
        %2879 = vmatpush1.bf16.msra.mxu0 0
        %2880 = vmatprep.subr.bf16.mxu0 0
        %2881 = vmatpush1.bf16.msra.mxu0 0
        %2882 = vmatprep.subr.bf16.mxu0 0
        %2883 = vmatpush1.bf16.msra.mxu0 0
        %2884 = vmatprep.subr.bf16.mxu0 0
        %2885 = vmatpush1.bf16.msra.mxu0 0
        %2886 = vmatprep.subr.bf16.mxu0 0
        %2887 = vmatpush1.bf16.msra.mxu0 0
        %2888 = vmatprep.subr.bf16.mxu0 0
        %2889 = vmatpush1.bf16.msra.mxu0 0
        %2890 = vmatprep.subr.bf16.mxu0 0
        %2891 = vmatpush1.bf16.msra.mxu0 0
        %2892 = vmatprep.subr.bf16.mxu0 0
        %2893 = vmatpush1.bf16.msra.mxu0 0
        %2894 = vmatprep.subr.bf16.mxu0 0
        %2895 = vmatpush1.bf16.msra.mxu0 0
        %2896 = vmatprep.subr.bf16.mxu0 0
        %2897 = vmatpush1.bf16.msra.mxu0 0
        %2898 = vmatprep.subr.bf16.mxu0 0
        %2899 = vmatpush1.bf16.msra.mxu0 0
        %2900 = vmatprep.subr.bf16.mxu0 0
        %2901 = vmatpush1.bf16.msra.mxu0 0
        %2902 = vmatprep.subr.bf16.mxu0 0
        %2903 = vmatpush1.bf16.msra.mxu0 0
        %2904 = vmatprep.mubr.bf16.mxu0 0
        %2905 = vmatmul.mubr.bf16.gmra.mrb[0].mxu0 %v2829
        %v2906 = vpop.f32.mrb[0].mxu0
        %v2907 = vadd.f32 %v2825, %v2906
        %v2908 = vpop.f32.mrb[0].mxu0
        %v2909 = vadd.f32 %v2825, %v2908
        %v2910 = vpop.f32.mrb[0].mxu0
        %v2911 = vpop.f32.mrb[0].mxu0
        %2912 = vdwg.mxu0
        %2913 = vst [vmem:[%s365] sm:$0xff] %v2866
        %2914 = vst [vmem:[%s365 + $0x8] sm:$0xff] %v2868
        %2915 = vst [vmem:[%s365 + $0x10] sm:$0xff] %v2907
        %2916 = vst [vmem:[%s365 + $0x18] sm:$0xff] %v2909
        %s2917 = sand.u32 %s228, 1
        %s2918 = scalar_lea.sflag [#allocation5], %s2917
        %s2919 = sand.u32 %s228, 1
        %s2920 = smul.addr %s2919, 32
        %s2921 = scalar_lea.vmem [#allocation4], %s2920
        // Predicated region
        $region53: #{tpu_custom_call.1} parent=51 // pred_check
          %p2922 = pneg %p238
        $region54: #{tpu_custom_call.1} parent=51 // pred_check_branch
          %2924 = sbr.rel (%p2922) target = $region56
        $region55: #{tpu_custom_call.1} parent=51 // pred_region
          %s2926 = ssub.s32 512, 512
          %2927 = vsyncadd %s2918, %s2926
          %s2928 = smul.addr %s22, 4
          %s2929 = smul.addr %s2928, 128
          %s2930 = scalar_lea.hbm %s8, %s2929
          %s2932 = sshll.u32 %s2921, 4
          %s2933 = int_to_ptr.vmem [resolvable:$true] %s2932
          %2935 = dma.vmem_to_hbm [thread:$0]  %s2933, 512, %s2930, %s2918
        $region56: #{tpu_custom_call.1} parent=51 // pred_fallthru
          _
      $region52: #{tpu_custom_call.1} parent=5 // pred_fallthru
        _
      %p2936 = scmp.le.s32.totalorder 2, %s17
      // Predicated region
      $region57: #{tpu_custom_call.1} parent=5 // pred_check
        %p2937 = pneg %p2936
      $region58: #{tpu_custom_call.1} parent=5 // pred_check_branch
        %2939 = sbr.rel (%p2937) target = $region60
      $region59: #{tpu_custom_call.1} parent=5 // pred_region
        %s2940 = ssub.s32 %s17, 2
        // Predicated region
        $region61: #{tpu_custom_call.1} parent=59 // pred_check
          %p2941 = pneg %p244
        $region62: #{tpu_custom_call.1} parent=59 // pred_check_branch
          %2943 = sbr.rel (%p2941) target = $region64
        $region63: #{tpu_custom_call.1} parent=59 // pred_region
          %s2944 = sand.u32 %s229, 1
          %s2945 = scalar_lea.sflag [#allocation5], %s2944
          %s2946 = sand.u32 %s229, 1
          %s2947 = smul.addr %s2946, 32
          %s2948 = scalar_lea.vmem [#allocation4], %s2947
          %2949 = dma.done %s2945, 512
        $region64: #{tpu_custom_call.1} parent=59 // pred_fallthru
          _
      $region60: #{tpu_custom_call.1} parent=5 // pred_fallthru
        _
    $region6: #{tpu_custom_call.1} parent=1 // loop_footer
      %s21 = sadd.s32 1, %s17
    $region7: #{tpu_custom_call.1} parent=1 // loop_footer_branch
      %16 = sbr.rel target = $region3
    $region8: #{tpu_custom_call.1} parent=1 // loop_exit
      _
    %2950 = vsyncpa [#allocation5], 1
    %s2951 = scalar_lea.sflag [#allocation5], 1
    %2952 = vsyncpa %s2951, 1

</llo_original>
